<compile_context>
chip_gen: v7x
topology: tpu7x:2x2x1
jax: 0.10.0
libtpu: 0.0.40
codegen_flags: <defaults>
</compile_context>

<pallas_src>
import functools
import math

import jax
import jax.numpy as jnp
from jax.experimental import pallas as pl
from jax.experimental.pallas import tpu as pltpu


# ------------------------- small helpers -------------------------

def _round_up(x, m):
    return ((x + m - 1) // m) * m


def _vmem_limit_bytes():
    """Generation-aware scoped-VMEM limit (v5e/v6e: 128 MiB phys, v7x: 64 MiB phys)."""
    cap = 64 * 1024 * 1024
    try:
        cap = int(pltpu.get_tpu_info().vmem_capacity_bytes)
    except Exception:
        pass
    return int(min(3 * cap // 4, 96 * 1024 * 1024))


def _pick_tile(r, target):
    """Lane-dim tile: multiple of 128, <= target, and >=2 grid steps when the padded
    extent allows it (so v7x's two TensorCores both get work).  Returns (tile, padded_r)."""
    rp = _round_up(max(r, 1), 128)
    tile = min(_round_up(target, 128), rp)
    if rp // tile < 2 and rp >= 256:
        tile = _round_up(rp // 2, 128)
    rp = _round_up(rp, tile)
    return tile, rp


def _pick_mode_tile(K, two_i, two_o, tr, budget_bytes=10 * 1024 * 1024):
    """Mode-axis tile so one buffer set (x + out + w blocks, bf16) stays under budget."""
    per_mode = 2 * (two_i * tr + two_o * tr + two_o * two_i)   # bf16 bytes / mode
    tk = max(1, min(K, budget_bytes // max(per_mode, 1)))
    while K % tk:
        tk -= 1
    return tk


# ------------------------- Pallas kernels -------------------------

def _spectral_kernel(x_ref, w_ref, o_ref):
    # x_ref: (TK, 2I, TR) bf16   rows = [xr ; xi]
    # w_ref: (TK, 2O, 2I) bf16   [[wr, -wi], [wi, wr]]
    # o_ref: (TK, 2O, TR) bf16   rows = [real ; imag]
    # Single batched MXU matmul per mode tile; f32 accumulation, bf16 store.
    o_ref[...] = jnp.einsum(
        'koi,kir->kor', w_ref[...], x_ref[...],
        preferred_element_type=jnp.float32).astype(o_ref.dtype)


def spectral_matmul(x_blk, w_blk, *, target_tr=1024):
    """Per-mode block-real complex matmul, lane-dense.

    x_blk: (K, 2I, R) bf16      w_blk: (K, 2O, 2I) bf16
    returns (K, 2O, R) bf16  (rows 0..O-1 = real, O..2O-1 = imag)
    """
    K, two_i, R = x_blk.shape
    two_o = w_blk.shape[1]

    tr, Rp = _pick_tile(R, target_tr)
    if Rp != R:
        x_blk = jnp.pad(x_blk, ((0, 0), (0, 0), (0, Rp - R)))

    tk = _pick_mode_tile(K, two_i, two_o, tr)
    # If the R grid collapses to one step, split the mode axis instead so v7x still
    # sees >=2 parallel grid steps.
    if Rp // tr == 1 and tk == K and K % 2 == 0:
        tk = K // 2

    out = pl.pallas_call(
        _spectral_kernel,
        out_shape=jax.ShapeDtypeStruct((K, two_o, Rp), jnp.bfloat16),
        grid=(K // tk, Rp // tr),
        in_specs=[
            pl.BlockSpec((tk, two_i, tr), lambda k, r: (k, 0, r)),
            pl.BlockSpec((tk, two_o, two_i), lambda k, r: (k, 0, 0)),
        ],
        out_specs=pl.BlockSpec((tk, two_o, tr), lambda k, r: (k, 0, r)),
        compiler_params=pltpu.CompilerParams(
            dimension_semantics=("parallel", "parallel"),
            vmem_limit_bytes=_vmem_limit_bytes()),
    )(x_blk, w_blk)
    return out[:, :, :R]


def _dual_ff_kernel(*refs, n_x, n_back, n_fore):
    # refs = (x_refs... , [w, b] * (n_back + n_fore), out_back[, out_fore])
    # x_refs : (1, C, TS) f32      w: (dout_l, din_l) bf16     b: (dout_l, 1) f32
    # outputs: (1, d_out, TS) f32  -- spatial dim lane-dense, direct slice-free writes.
    n_w = 2 * (n_back + n_fore)
    x_refs = refs[:n_x]
    w_refs = refs[n_x:n_x + n_w]
    out_refs = refs[n_x + n_w:]

    x = x_refs[0][0]
    for r in x_refs[1:]:
        x = x + r[0]                       # fused xx + xy add (f32), never hits HBM
    xb = x.astype(jnp.bfloat16)            # single bf16 cast for the matmul operands

    def run_stack(pairs):
        h = xb
        n = len(pairs)
        for i, (w_ref, b_ref) in enumerate(pairs):
            y = jnp.dot(w_ref[...], h, preferred_element_type=jnp.float32)  # (dout_l, TS)
            y = y + b_ref[...]                                              # f32 bias
            if i < n - 1:
                h = jnp.maximum(y, 0.0).astype(jnp.bfloat16)                # relu in f32
            else:
                h = y
        return h

    back = [(w_refs[2 * i], w_refs[2 * i + 1]) for i in range(n_back)]
    out_refs[0][0] = run_stack(back).astype(out_refs[0].dtype)
    if n_fore:
        fore = [(w_refs[2 * (n_back + i)], w_refs[2 * (n_back + i) + 1])
                for i in range(n_fore)]
        out_refs[1][0] = run_stack(fore).astype(out_refs[1].dtype)


def dual_feed_forward(acts, back_params, fore_params, *, target_ts=4096):
    """Fused backcast/forecast FeedForward, channels-first.

    acts: list of 1 or 2 arrays of shape (B, C, S) f32 (summed inside the kernel).
    returns tuple of (B, d_out, S) f32 arrays (backcast[, forecast]).
    """
    B, C, S = acts[0].shape
    n_x = len(acts)
    n_back = len(back_params)
    n_fore = len(fore_params) if fore_params is not None else 0
    d_out = back_params[-1][0].shape[0]

    ts, Sp = _pick_tile(S, target_ts)
    if Sp != S:
        acts = [jnp.pad(a, ((0, 0), (0, 0), (0, Sp - S))) for a in acts]

    x_specs = [pl.BlockSpec((1, C, ts), lambda b, s: (b, 0, s)) for _ in acts]

    w_inputs, w_specs = [], []
    all_params = list(back_params) + (list(fore_params) if n_fore else [])
    for (w, b) in all_params:
        w_inputs.append(w.astype(jnp.bfloat16))                 # (dout_l, din_l)
        w_specs.append(pl.BlockSpec(tuple(w.shape), lambda b_, s_: (0, 0)))
        b2 = b.reshape(-1, 1).astype(jnp.float32)                # (dout_l, 1)
        w_inputs.append(b2)
        w_specs.append(pl.BlockSpec(tuple(b2.shape), lambda b_, s_: (0, 0)))

    n_out = 2 if n_fore else 1
    out_shape = tuple(jax.ShapeDtypeStruct((B, d_out, Sp), jnp.float32)
                      for _ in range(n_out))
    out_specs = tuple(pl.BlockSpec((1, d_out, ts), lambda b, s: (b, 0, s))
                      for _ in range(n_out))
    if n_out == 1:
        out_shape, out_specs = out_shape[0], out_specs[0]

    outs = pl.pallas_call(
        functools.partial(_dual_ff_kernel, n_x=n_x, n_back=n_back, n_fore=n_fore),
        out_shape=out_shape,
        grid=(B, Sp // ts),
        in_specs=x_specs + w_specs,
        out_specs=out_specs,
        compiler_params=pltpu.CompilerParams(
            dimension_semantics=("parallel", "parallel"),
            vmem_limit_bytes=_vmem_limit_bytes()),
    )(*acts, *w_inputs)

    if n_out == 1:
        outs = (outs,)
    return tuple(o[:, :, :S] for o in outs)


# ------------------------- Module logic (FFT glue in JAX) -------------------------

def _block_real_weight(w):
    """PyTorch-layout Fourier weight (I, O, K, 2) -> block-real (K, 2O, 2I) bf16."""
    wr = jnp.transpose(w[..., 0], (2, 1, 0))                    # (K, O, I)
    wi = jnp.transpose(w[..., 1], (2, 1, 0))
    top = jnp.concatenate([wr, -wi], axis=-1)                   # (K, O, 2I)
    bot = jnp.concatenate([wi, wr], axis=-1)
    return jnp.concatenate([top, bot], axis=1).astype(jnp.bfloat16)


def _pack_modes(xs):
    """complex (K, I, R) -> block-real (K, 2I, R) bf16."""
    return jnp.concatenate([jnp.real(xs), jnp.imag(xs)], axis=1).astype(jnp.bfloat16)


def _unpack_modes(o):
    """block-real (K, 2O, R) bf16 -> complex64 (K, O, R)."""
    K, two_o, R = o.shape
    o = o.astype(jnp.float32).reshape(K, 2, two_o // 2, R)
    return o[:, 0] + 1j * o[:, 1]


def forward_fourier(x, params, modes_x, modes_y, mode="full"):
    """x: (B, M, N, I) channels-last.  Returns xx, xy: (B, O, M, N) channels-first."""
    B, M, N, I = x.shape
    Kx, Ky = modes_x, modes_y
    Mf, Nf = M // 2 + 1, N // 2 + 1

    # ----- y direction: FFT along N (axis=2 of the channels-last input) -----
    x_fty = jnp.fft.rfft(x, axis=2, norm="ortho")                 # (B, M, Nf, I) c64
    if mode == "full":
        wy_blk = _block_real_weight(params["wy"])                  # (Ky, 2O, 2I)
        O = wy_blk.shape[1] // 2
        xs = jnp.transpose(x_fty[:, :, :Ky, :], (2, 3, 0, 1)).reshape(Ky, I, B * M)
        o = spectral_matmul(_pack_modes(xs), wy_blk)               # (Ky, 2O, B*M) bf16
        oc = _unpack_modes(o).reshape(Ky, O, B, M)
        oc = jnp.transpose(oc, (2, 1, 3, 0))                       # (B, O, M, Ky)
    else:  # 'low-pass'
        oc = jnp.transpose(x_fty[:, :, :Ky, :], (0, 3, 1, 2))      # (B, I, M, Ky)
        O = I
    out_ft = jnp.pad(oc, ((0, 0), (0, 0), (0, 0), (0, Nf - Ky)))
    xy = jnp.fft.irfft(out_ft, n=N, axis=-1, norm="ortho")         # (B, O, M, N)

    # ----- x direction: FFT along M (axis=1 of the channels-last input) -----
    x_ftx = jnp.fft.rfft(x, axis=1, norm="ortho")                  # (B, Mf, N, I) c64
    if mode == "full":
        wx_blk = _block_real_weight(params["wx"])                  # (Kx, 2O, 2I)
        xs = jnp.transpose(x_ftx[:, :Kx, :, :], (1, 3, 0, 2)).reshape(Kx, I, B * N)
        o = spectral_matmul(_pack_modes(xs), wx_blk)               # (Kx, 2O, B*N) bf16
        oc = _unpack_modes(o).reshape(Kx, O, B, N)
        oc = jnp.transpose(oc, (2, 1, 0, 3))                       # (B, O, Kx, N)
    else:  # 'low-pass'
        oc = jnp.transpose(x_ftx[:, :Kx, :, :], (0, 3, 1, 2))      # (B, I, Kx, N)
    out_ft = jnp.pad(oc, ((0, 0), (0, 0), (0, Mf - Kx), (0, 0)))
    xx = jnp.fft.irfft(out_ft, n=M, axis=-2, norm="ortho")         # (B, O, M, N)

    return xx, xy


def spectral_conv2d_forward(x, params, modes_x, modes_y, mode="full", use_fork=True):
    """Returns (backcast, forecast) like the PyTorch module; outputs are (B, M, N, d_out)."""
    B, M, N, C = x.shape
    if mode != "no-fourier":
        xx, xy = forward_fourier(x, params, modes_x, modes_y, mode=mode)
        O = xx.shape[1]
        acts = [xx.reshape(B, O, M * N), xy.reshape(B, O, M * N)]   # xx+xy fused in-kernel
    else:
        acts = [jnp.transpose(x, (0, 3, 1, 2)).reshape(B, C, M * N)]

    fore = params["forecast_ff"] if use_fork else None
    outs = dual_feed_forward(acts, params["backcast_ff"], fore)
    d_out = params["backcast_ff"][-1][0].shape[0]

    def to_channels_last(o_cf):
        return jnp.transpose(o_cf.reshape(B, d_out, M, N), (0, 2, 3, 1))

    b = to_channels_last(outs[0])
    f = to_channels_last(outs[1]) if use_fork else None
    return b, f


# ------------------------- Deterministic parameter init -------------------------

def xavier_normal_fourier(key, in_dim, out_dim, n_modes):
    # PyTorch xavier_normal_ on a (I, O, K, 2) tensor:
    # fan_in = O*K*2, fan_out = I*K*2, std = sqrt(2/(fan_in+fan_out))
    recept = n_modes * 2
    fan_in, fan_out = out_dim * recept, in_dim * recept
    std = math.sqrt(2.0 / (fan_in + fan_out))
    return std * jax.random.normal(key, (in_dim, out_dim, n_modes, 2), dtype=jnp.float32)


def init_feed_forward(key, dim, factor, n_layers):
    # nn.Linear-style (d_out, d_in) weights so the kernel's transposed (channels-first)
    # matmul uses them directly.
    params = []
    keys = jax.random.split(key, 2 * n_layers)
    for i in range(n_layers):
        d_in = dim if i == 0 else dim * factor
        d_out = dim if i == n_layers - 1 else dim * factor
        bound = 1.0 / math.sqrt(d_in)
        w = bound * jax.random.normal(keys[2 * i], (d_out, d_in), dtype=jnp.float32)
        b = bound * jax.random.normal(keys[2 * i + 1], (d_out,), dtype=jnp.float32)
        params.append((w, b))
    return params


def init_params(key, in_dim, out_dim, modes_x, modes_y, factor, n_ff_layers):
    assert in_dim == out_dim, "'full' mode writes O channels into an I-channel buffer"
    k1, k2, k3, k4 = jax.random.split(key, 4)
    return {
        "wx": xavier_normal_fourier(k1, in_dim, out_dim, modes_x),   # (I, O, Kx, 2)
        "wy": xavier_normal_fourier(k2, in_dim, out_dim, modes_y),   # (I, O, Ky, 2)
        "backcast_ff": init_feed_forward(k3, out_dim, factor, n_ff_layers),
        "forecast_ff": init_feed_forward(k4, out_dim, factor, n_ff_layers),
    }


# ------------------------- Demo -------------------------

if __name__ == "__main__":
    B, M, N = 2, 16, 16
    in_dim = out_dim = 8
    modes_x = modes_y = 8
    factor = 2
    n_ff_layers = 2

    key = jax.random.PRNGKey(0)
    kx, kp = jax.random.split(key)
    x = jax.random.normal(kx, (B, M, N, in_dim), dtype=jnp.float32)
    params = init_params(kp, in_dim, out_dim, modes_x, modes_y, factor, n_ff_layers)

    fwd = jax.jit(functools.partial(spectral_conv2d_forward,
                                    modes_x=modes_x, modes_y=modes_y,
                                    mode="full", use_fork=True))
    b_out, f_out = fwd(x, params)
    jax.block_until_ready(b_out)
    jax.block_until_ready(f_out)

    assert b_out.shape == (B, M, N, out_dim)
    assert f_out.shape == (B, M, N, out_dim)
    assert jnp.all(jnp.isfinite(b_out)) and jnp.all(jnp.isfinite(f_out))
    print("KERNEL_OK")
</pallas_src>

<mosaic_0001>
module attributes {stable_mosaic.version = 11 : i64} {
  func.func @_spectral_kernel(%arg0: i32, %arg1: i32, %arg2: memref<4x16x128xbf16, #tpu.memory_space<vmem>>, %arg3: memref<4x16x16xbf16, #tpu.memory_space<vmem>>, %arg4: memref<4x16x128xbf16, #tpu.memory_space<vmem>>) attributes {dimension_semantics = [#tpu.dimension_semantics<parallel>, #tpu.dimension_semantics<parallel>], iteration_bounds = array<i64: 2, 1>, scalar_prefetch = 0 : i64, scratch_operands = 0 : i64, tpu.core_type = #tpu.core_type<tc>, window_params = [{transform_indices = @transform_0, window_bounds = array<i64: 4, 16, 128>}, {transform_indices = @transform_1, window_bounds = array<i64: 4, 16, 16>}, {transform_indices = @transform_2, window_bounds = array<i64: 4, 16, 128>}]} {
    %c0 = arith.constant 0 : index
    %c0_0 = arith.constant 0 : index
    %c0_1 = arith.constant 0 : index
    %0 = vector.load %arg3[%c0, %c0_0, %c0_1] : memref<4x16x16xbf16, #tpu.memory_space<vmem>>, vector<4x16x16xbf16>
    %c0_2 = arith.constant 0 : index
    %c0_3 = arith.constant 0 : index
    %c0_4 = arith.constant 0 : index
    %1 = vector.load %arg2[%c0_2, %c0_3, %c0_4] : memref<4x16x128xbf16, #tpu.memory_space<vmem>>, vector<4x16x128xbf16>
    "tpu.trace_start"() <{level = 10 : i32, message = "koi,kir->kor"}> : () -> ()
    %cst = arith.constant dense<0.000000e+00> : vector<4x16x128xf32>
    %2 = tpu.matmul %0, %1, %cst {dimension_numbers = #tpu.dot_dimension_numbers<[2], [1], [1], [2], [0, 0, 0, 1, 1, 2], [0], [0]>} : vector<4x16x16xbf16>, vector<4x16x128xbf16>, vector<4x16x128xf32> -> vector<4x16x128xf32>
    "tpu.trace_stop"() : () -> ()
    %3 = arith.truncf %2 : vector<4x16x128xf32> to vector<4x16x128xbf16>
    %c0_5 = arith.constant 0 : index
    %c0_6 = arith.constant 0 : index
    %c0_7 = arith.constant 0 : index
    %4 = vector.load %arg4[%c0_5, %c0_6, %c0_7] : memref<4x16x128xbf16, #tpu.memory_space<vmem>>, vector<4x16x128xbf16>
    tpu.vector_store %arg4[%c0_5, %c0_6, %c0_7], %3 {strides = array<i32>} : memref<4x16x128xbf16, #tpu.memory_space<vmem>>, vector<4x16x128xbf16>,
    return
  }
  func.func @transform_0(%arg0: i32, %arg1: i32) -> (i32, i32, i32) {
    %c0_i32 = arith.constant 0 : i32
    %c0_i32_0 = arith.constant 0 : i32
    return %arg0, %c0_i32, %arg1 : i32, i32, i32
  }
  func.func @transform_1(%arg0: i32, %arg1: i32) -> (i32, i32, i32) {
    %c0_i32 = arith.constant 0 : i32
    %c0_i32_0 = arith.constant 0 : i32
    %c0_i32_1 = arith.constant 0 : i32
    return %arg0, %c0_i32, %c0_i32_0 : i32, i32, i32
  }
  func.func @transform_2(%arg0: i32, %arg1: i32) -> (i32, i32, i32) {
    %c0_i32 = arith.constant 0 : i32
    %c0_i32_0 = arith.constant 0 : i32
    return %arg0, %c0_i32, %arg1 : i32, i32, i32
  }
}

module attributes {stable_mosaic.version = 11 : i64} {
  func.func @_dual_ff_kernel(%arg0: i32, %arg1: i32, %arg2: memref<1x8x128xf32, #tpu.memory_space<vmem>>, %arg3: memref<1x8x128xf32, #tpu.memory_space<vmem>>, %arg4: memref<16x8xbf16, #tpu.memory_space<vmem>>, %arg5: memref<16x1xf32, #tpu.memory_space<vmem>>, %arg6: memref<8x16xbf16, #tpu.memory_space<vmem>>, %arg7: memref<8x1xf32, #tpu.memory_space<vmem>>, %arg8: memref<16x8xbf16, #tpu.memory_space<vmem>>, %arg9: memref<16x1xf32, #tpu.memory_space<vmem>>, %arg10: memref<8x16xbf16, #tpu.memory_space<vmem>>, %arg11: memref<8x1xf32, #tpu.memory_space<vmem>>, %arg12: memref<1x8x128xf32, #tpu.memory_space<vmem>>, %arg13: memref<1x8x128xf32, #tpu.memory_space<vmem>>) attributes {dimension_semantics = [#tpu.dimension_semantics<parallel>, #tpu.dimension_semantics<parallel>], iteration_bounds = array<i64: 2, 2>, scalar_prefetch = 0 : i64, scratch_operands = 0 : i64, tpu.core_type = #tpu.core_type<tc>, window_params = [{transform_indices = @transform_0, window_bounds = array<i64: 1, 8, 128>}, {transform_indices = @transform_1, window_bounds = array<i64: 1, 8, 128>}, {pipeline_mode = #tpu.pipeline_mode<synchronous>, transform_indices = @transform_2, window_bounds = array<i64: 16, 8>}, {pipeline_mode = #tpu.pipeline_mode<synchronous>, transform_indices = @transform_3, window_bounds = array<i64: 16, 1>}, {pipeline_mode = #tpu.pipeline_mode<synchronous>, transform_indices = @transform_4, window_bounds = array<i64: 8, 16>}, {pipeline_mode = #tpu.pipeline_mode<synchronous>, transform_indices = @transform_5, window_bounds = array<i64: 8, 1>}, {pipeline_mode = #tpu.pipeline_mode<synchronous>, transform_indices = @transform_6, window_bounds = array<i64: 16, 8>}, {pipeline_mode = #tpu.pipeline_mode<synchronous>, transform_indices = @transform_7, window_bounds = array<i64: 16, 1>}, {pipeline_mode = #tpu.pipeline_mode<synchronous>, transform_indices = @transform_8, window_bounds = array<i64: 8, 16>}, {pipeline_mode = #tpu.pipeline_mode<synchronous>, transform_indices = @transform_9, window_bounds = array<i64: 8, 1>}, {transform_indices = @transform_10, window_bounds = array<i64: 1, 8, 128>}, {transform_indices = @transform_11, window_bounds = array<i64: 1, 8, 128>}]} {
    %c0 = arith.constant 0 : index
    %c0_0 = arith.constant 0 : index
    %c0_1 = arith.constant 0 : index
    %0 = vector.load %arg2[%c0, %c0_0, %c0_1] : memref<1x8x128xf32, #tpu.memory_space<vmem>>, vector<1x8x128xf32>
    %1 = vector.shape_cast %0 : vector<1x8x128xf32> to vector<8x128xf32>
    %c0_2 = arith.constant 0 : index
    %c0_3 = arith.constant 0 : index
    %c0_4 = arith.constant 0 : index
    %2 = vector.load %arg3[%c0_2, %c0_3, %c0_4] : memref<1x8x128xf32, #tpu.memory_space<vmem>>, vector<1x8x128xf32>
    %3 = vector.shape_cast %2 : vector<1x8x128xf32> to vector<8x128xf32>
    %4 = arith.addf %1, %3 : vector<8x128xf32>
    %5 = arith.truncf %4 : vector<8x128xf32> to vector<8x128xbf16>
    %c0_5 = arith.constant 0 : index
    %c0_6 = arith.constant 0 : index
    %6 = vector.load %arg4[%c0_5, %c0_6] : memref<16x8xbf16, #tpu.memory_space<vmem>>, vector<16x8xbf16>
    %cst = arith.constant dense<0.000000e+00> : vector<16x128xf32>
    %7 = tpu.matmul %6, %5, %cst {dimension_numbers = #tpu.dot_dimension_numbers<[1], [0], [0], [1], [0, 0, 1, 1], [], []>} : vector<16x8xbf16>, vector<8x128xbf16>, vector<16x128xf32> -> vector<16x128xf32>
    %c0_7 = arith.constant 0 : index
    %c0_8 = arith.constant 0 : index
    %8 = vector.load %arg5[%c0_7, %c0_8] : memref<16x1xf32, #tpu.memory_space<vmem>>, vector<16x1xf32>
    %9 = vector.broadcast %8 : vector<16x1xf32> to vector<16x128xf32>
    %10 = arith.addf %7, %9 : vector<16x128xf32>
    %cst_9 = arith.constant 0.000000e+00 : f32
    %11 = vector.broadcast %cst_9 : f32 to vector<16x128xf32>
    %12 = arith.maximumf %10, %11 : vector<16x128xf32>
    %13 = arith.truncf %12 : vector<16x128xf32> to vector<16x128xbf16>
    %c0_10 = arith.constant 0 : index
    %c0_11 = arith.constant 0 : index
    %14 = vector.load %arg6[%c0_10, %c0_11] : memref<8x16xbf16, #tpu.memory_space<vmem>>, vector<8x16xbf16>
    %cst_12 = arith.constant dense<0.000000e+00> : vector<8x128xf32>
    %15 = tpu.matmul %14, %13, %cst_12 {dimension_numbers = #tpu.dot_dimension_numbers<[1], [0], [0], [1], [0, 0, 1, 1], [], []>} : vector<8x16xbf16>, vector<16x128xbf16>, vector<8x128xf32> -> vector<8x128xf32>
    %c0_13 = arith.constant 0 : index
    %c0_14 = arith.constant 0 : index
    %16 = vector.load %arg7[%c0_13, %c0_14] : memref<8x1xf32, #tpu.memory_space<vmem>>, vector<8x1xf32>
    %17 = vector.broadcast %16 : vector<8x1xf32> to vector<8x128xf32>
    %18 = arith.addf %15, %17 : vector<8x128xf32>
    %c0_15 = arith.constant 0 : index
    %c0_16 = arith.constant 0 : index
    %c0_17 = arith.constant 0 : index
    %19 = vector.load %arg12[%c0_15, %c0_16, %c0_17] : memref<1x8x128xf32, #tpu.memory_space<vmem>>, vector<1x8x128xf32>
    %20 = vector.shape_cast %19 : vector<1x8x128xf32> to vector<8x128xf32>
    %21 = vector.shape_cast %18 : vector<8x128xf32> to vector<1x8x128xf32>
    tpu.vector_store %arg12[%c0_15, %c0_16, %c0_17], %21 {strides = array<i32>} : memref<1x8x128xf32, #tpu.memory_space<vmem>>, vector<1x8x128xf32>,
    %c0_18 = arith.constant 0 : index
    %c0_19 = arith.constant 0 : index
    %22 = vector.load %arg8[%c0_18, %c0_19] : memref<16x8xbf16, #tpu.memory_space<vmem>>, vector<16x8xbf16>
    %cst_20 = arith.constant dense<0.000000e+00> : vector<16x128xf32>
    %23 = tpu.matmul %22, %5, %cst_20 {dimension_numbers = #tpu.dot_dimension_numbers<[1], [0], [0], [1], [0, 0, 1, 1], [], []>} : vector<16x8xbf16>, vector<8x128xbf16>, vector<16x128xf32> -> vector<16x128xf32>
    %c0_21 = arith.constant 0 : index
    %c0_22 = arith.constant 0 : index
    %24 = vector.load %arg9[%c0_21, %c0_22] : memref<16x1xf32, #tpu.memory_space<vmem>>, vector<16x1xf32>
    %25 = vector.broadcast %24 : vector<16x1xf32> to vector<16x128xf32>
    %26 = arith.addf %23, %25 : vector<16x128xf32>
    %cst_23 = arith.constant 0.000000e+00 : f32
    %27 = vector.broadcast %cst_23 : f32 to vector<16x128xf32>
    %28 = arith.maximumf %26, %27 : vector<16x128xf32>
    %29 = arith.truncf %28 : vector<16x128xf32> to vector<16x128xbf16>
    %c0_24 = arith.constant 0 : index
    %c0_25 = arith.constant 0 : index
    %30 = vector.load %arg10[%c0_24, %c0_25] : memref<8x16xbf16, #tpu.memory_space<vmem>>, vector<8x16xbf16>
    %cst_26 = arith.constant dense<0.000000e+00> : vector<8x128xf32>
    %31 = tpu.matmul %30, %29, %cst_26 {dimension_numbers = #tpu.dot_dimension_numbers<[1], [0], [0], [1], [0, 0, 1, 1], [], []>} : vector<8x16xbf16>, vector<16x128xbf16>, vector<8x128xf32> -> vector<8x128xf32>
    %c0_27 = arith.constant 0 : index
    %c0_28 = arith.constant 0 : index
    %32 = vector.load %arg11[%c0_27, %c0_28] : memref<8x1xf32, #tpu.memory_space<vmem>>, vector<8x1xf32>
    %33 = vector.broadcast %32 : vector<8x1xf32> to vector<8x128xf32>
    %34 = arith.addf %31, %33 : vector<8x128xf32>
    %c0_29 = arith.constant 0 : index
    %c0_30 = arith.constant 0 : index
    %c0_31 = arith.constant 0 : index
    %35 = vector.load %arg13[%c0_29, %c0_30, %c0_31] : memref<1x8x128xf32, #tpu.memory_space<vmem>>, vector<1x8x128xf32>
    %36 = vector.shape_cast %35 : vector<1x8x128xf32> to vector<8x128xf32>
    %37 = vector.shape_cast %34 : vector<8x128xf32> to vector<1x8x128xf32>
    tpu.vector_store %arg13[%c0_29, %c0_30, %c0_31], %37 {strides = array<i32>} : memref<1x8x128xf32, #tpu.memory_space<vmem>>, vector<1x8x128xf32>,
    return
  }
  func.func @transform_0(%arg0: i32, %arg1: i32) -> (i32, i32, i32) {
    %c0_i32 = arith.constant 0 : i32
    %c0_i32_0 = arith.constant 0 : i32
    return %arg0, %c0_i32, %arg1 : i32, i32, i32
  }
  func.func @transform_1(%arg0: i32, %arg1: i32) -> (i32, i32, i32) {
    %c0_i32 = arith.constant 0 : i32
    %c0_i32_0 = arith.constant 0 : i32
    return %arg0, %c0_i32, %arg1 : i32, i32, i32
  }
  func.func @transform_2(%arg0: i32, %arg1: i32) -> (i32, i32) {
    %c0_i32 = arith.constant 0 : i32
    %c0_i32_0 = arith.constant 0 : i32
    %c0_i32_1 = arith.constant 0 : i32
    return %c0_i32, %c0_i32_0 : i32, i32
  }
  func.func @transform_3(%arg0: i32, %arg1: i32) -> (i32, i32) {
    %c0_i32 = arith.constant 0 : i32
    %c0_i32_0 = arith.constant 0 : i32
    %c0_i32_1 = arith.constant 0 : i32
    return %c0_i32, %c0_i32_0 : i32, i32
  }
  func.func @transform_4(%arg0: i32, %arg1: i32) -> (i32, i32) {
    %c0_i32 = arith.constant 0 : i32
    %c0_i32_0 = arith.constant 0 : i32
    %c0_i32_1 = arith.constant 0 : i32
    return %c0_i32, %c0_i32_0 : i32, i32
  }
  func.func @transform_5(%arg0: i32, %arg1: i32) -> (i32, i32) {
    %c0_i32 = arith.constant 0 : i32
    %c0_i32_0 = arith.constant 0 : i32
    %c0_i32_1 = arith.constant 0 : i32
    return %c0_i32, %c0_i32_0 : i32, i32
  }
  func.func @transform_6(%arg0: i32, %arg1: i32) -> (i32, i32) {
    %c0_i32 = arith.constant 0 : i32
    %c0_i32_0 = arith.constant 0 : i32
    %c0_i32_1 = arith.constant 0 : i32
    return %c0_i32, %c0_i32_0 : i32, i32
  }
  func.func @transform_7(%arg0: i32, %arg1: i32) -> (i32, i32) {
    %c0_i32 = arith.constant 0 : i32
    %c0_i32_0 = arith.constant 0 : i32
    %c0_i32_1 = arith.constant 0 : i32
    return %c0_i32, %c0_i32_0 : i32, i32
  }
  func.func @transform_8(%arg0: i32, %arg1: i32) -> (i32, i32) {
    %c0_i32 = arith.constant 0 : i32
    %c0_i32_0 = arith.constant 0 : i32
    %c0_i32_1 = arith.constant 0 : i32
    return %c0_i32, %c0_i32_0 : i32, i32
  }
  func.func @transform_9(%arg0: i32, %arg1: i32) -> (i32, i32) {
    %c0_i32 = arith.constant 0 : i32
    %c0_i32_0 = arith.constant 0 : i32
    %c0_i32_1 = arith.constant 0 : i32
    return %c0_i32, %c0_i32_0 : i32, i32
  }
  func.func @transform_10(%arg0: i32, %arg1: i32) -> (i32, i32, i32) {
    %c0_i32 = arith.constant 0 : i32
    %c0_i32_0 = arith.constant 0 : i32
    return %arg0, %c0_i32, %arg1 : i32, i32, i32
  }
  func.func @transform_11(%arg0: i32, %arg1: i32) -> (i32, i32, i32) {
    %c0_i32 = arith.constant 0 : i32
    %c0_i32_0 = arith.constant 0 : i32
    return %arg0, %c0_i32, %arg1 : i32, i32, i32
  }
}

</mosaic_0001>

<llo_original>
// kernel: reverse.6
$region0: #{reverse.6}
  #allocation0 [shape = 's32[1]{0}', space=sflag, size = 0x4, scoped, tag = 'scoped memory for reverse.6']
  %s0 = inlined_call_operand.vmem [shape: f32[2,8,16,7], index: 0, kind: input, shape index: {}]
  %s1 = inlined_call_operand.vmem [shape: f32[2,8,16,7], index: 1, kind: output, shape index: {}]
  %s2 = scalar_lea.vmem %s0, 96
  %v3 = vld [vmem:[%s2] sm:$0xff]
  %4 = vst [vmem:[%s1] sm:$0xff] %v3
  %s5 = scalar_lea.vmem %s0, 80
  %v6 = vld [vmem:[%s5] sm:$0xff]
  %s7 = scalar_lea.vmem %s1, 16
  %8 = vst [vmem:[%s7] sm:$0xff] %v6
  %s9 = scalar_lea.vmem %s0, 64
  %v10 = vld [vmem:[%s9] sm:$0xff]
  %s11 = scalar_lea.vmem %s1, 32
  %12 = vst [vmem:[%s11] sm:$0xff] %v10
  %s13 = scalar_lea.vmem %s0, 48
  %v14 = vld [vmem:[%s13] sm:$0xff]
  %s15 = scalar_lea.vmem %s1, 48
  %16 = vst [vmem:[%s15] sm:$0xff] %v14
  %s17 = scalar_lea.vmem %s0, 32
  %v18 = vld [vmem:[%s17] sm:$0xff]
  %s19 = scalar_lea.vmem %s1, 64
  %20 = vst [vmem:[%s19] sm:$0xff] %v18
  %s21 = scalar_lea.vmem %s0, 16
  %v22 = vld [vmem:[%s21] sm:$0xff]
  %s23 = scalar_lea.vmem %s1, 80
  %24 = vst [vmem:[%s23] sm:$0xff] %v22
  %v25 = vld [vmem:[%s0] sm:$0xff]
  %s26 = scalar_lea.vmem %s1, 96
  %27 = vst [vmem:[%s26] sm:$0xff] %v25
  %s28 = scalar_lea.vmem %s0, 104
  %v29 = vld [vmem:[%s28] sm:$0xff]
  %s30 = scalar_lea.vmem %s1, 8
  %31 = vst [vmem:[%s30] sm:$0xff] %v29
  %s32 = scalar_lea.vmem %s0, 88
  %v33 = vld [vmem:[%s32] sm:$0xff]
  %s34 = scalar_lea.vmem %s1, 24
  %35 = vst [vmem:[%s34] sm:$0xff] %v33
  %s36 = scalar_lea.vmem %s0, 72
  %v37 = vld [vmem:[%s36] sm:$0xff]
  %s38 = scalar_lea.vmem %s1, 40
  %39 = vst [vmem:[%s38] sm:$0xff] %v37
  %s40 = scalar_lea.vmem %s0, 56
  %v41 = vld [vmem:[%s40] sm:$0xff]
  %s42 = scalar_lea.vmem %s1, 56
  %43 = vst [vmem:[%s42] sm:$0xff] %v41
  %s44 = scalar_lea.vmem %s0, 40
  %v45 = vld [vmem:[%s44] sm:$0xff]
  %s46 = scalar_lea.vmem %s1, 72
  %47 = vst [vmem:[%s46] sm:$0xff] %v45
  %s48 = scalar_lea.vmem %s0, 24
  %v49 = vld [vmem:[%s48] sm:$0xff]
  %s50 = scalar_lea.vmem %s1, 88
  %51 = vst [vmem:[%s50] sm:$0xff] %v49
  %s52 = scalar_lea.vmem %s0, 8
  %v53 = vld [vmem:[%s52] sm:$0xff]
  %s54 = scalar_lea.vmem %s1, 104
  %55 = vst [vmem:[%s54] sm:$0xff] %v53

// kernel: spectral_conv2d_forward.4
$region0: #{spectral_conv2d_forward.4}
  #allocation0 [shape = 'u32[]', space=smem, size = 0x4, offset = 0x4, fixed_abs, tag = 'smem constant byte address 0x4 - core index']
  #allocation1 [shape = 'u32[144,128]{1,0:T(1,128)}', space=vmem, size = 0x12000, scoped, tag = 'internal scratch']
  %s0 = inlined_call_operand.vmem [shape: bf16[8,16,128], index: 0, kind: input, shape index: {}]
  %s1 = inlined_call_operand.vmem [shape: bf16[8,16,16], index: 1, kind: input, shape index: {}]
  %s2 = inlined_call_operand.vmem [shape: bf16[8,16,128], index: 2, kind: output, shape index: {}]
  %s3 = sld [smem:[#allocation0]]
  $region41: #{spectral_conv2d_forward.4} parent=0
    _
  %s5 = ssub.s32 1, %s3
  %s6 = scalar_select 0, %s5, %s3
  loop: start=0, step=1, limit=4
  $region2: #{spectral_conv2d_forward.4} parent=0 // loop_pre_header
    _
  $region3: #{spectral_conv2d_forward.4} parent=0 // loop_header
    %s8 = sphi 0, %s12
    %p9 = scmp.ge.s32.totalorder %s8, 4
    %s15 = sphi 0, %s27
    %s16 = sphi 0, %s23
    %s17 = sphi 0, %s15
    %s18 = sphi 0, %s16
    %s19 = sphi 0, %s17
    %s20 = sphi 0, %s18
    %s32 = sphi 0, %s34
    %s35 = sphi 0, %s32
    %s36 = sphi 0, %s35
    %s52 = sphi 0, %s36
    %s58 = sphi 0, %s60
    %s61 = sphi 0, %s58
    %s62 = sphi 0, %s61
    %s78 = sphi 0, %s62
    %s86 = sphi 0, %s88
    %s89 = sphi 0, %s86
    %s90 = sphi 0, %s89
    %s106 = sphi 0, %s90
  $region4: #{spectral_conv2d_forward.4} parent=0 // loop_header_branch
    %11 = sbr.rel (%p9) target = $region8
  $region5: #{spectral_conv2d_forward.4} parent=0 // loop_body
    %s13 = ssub.s32 %s8, 1
    %s14 = ssub.s32 %s8, 2
    %s21 = sadd.s32 1, %s16
    %p22 = scmp.ge.s32.totalorder %s21, 1
    %s23 = scalar_select %p22, 0, %s21
    %s24 = sadd.s32 1, %s15
    %s25 = scalar_select %p22, %s24, %s15
    %p26 = scmp.ge.s32.totalorder %s25, 2
    %s27 = scalar_select %p26, 0, %s25
    %s28 = ssub.s32 %s15, %s27
    %s29 = ssub.s32 %s16, %s23
    %s30 = sor.u32 %s28, %s29
    %p31 = scmp.eq.s32.totalorder %s30, 0
    %s33 = sadd.s32 %s32, 1
    %s34 = scalar_select %p31, %s32, %s33
    %p37 = pneg %p31
    %p38 = scmp.eq.s32.totalorder %s8, 1
    %p39 = por %p37, %p38
    %p40 = scmp.ne.s32.totalorder %s32, %s35
    %p41 = scmp.eq.s32.totalorder %s8, 0
    %p42 = por %p40, %p41
    %p43 = scmp.ne.s32.totalorder %s32, %s35
    %p44 = scmp.eq.s32.totalorder %s13, 1
    %p45 = por %p43, %p44
    %p46 = scmp.ne.s32.totalorder %s35, %s36
    %p47 = scmp.eq.s32.totalorder %s13, 0
    %p48 = por %p46, %p47
    %p49 = scmp.ne.s32.totalorder %s35, %s36
    %p50 = scmp.eq.s32.totalorder %s14, 1
    %p51 = por %p49, %p50
    %p53 = scmp.ne.s32.totalorder %s36, %s52
    %p54 = scmp.eq.s32.totalorder %s14, 0
    %p55 = por %p53, %p54
    %s56 = ssub.s32 %s15, %s27
    %p57 = scmp.eq.s32.totalorder %s56, 0
    %s59 = sadd.s32 %s58, 1
    %s60 = scalar_select %p57, %s58, %s59
    %p63 = pneg %p57
    %p64 = scmp.eq.s32.totalorder %s8, 1
    %p65 = por %p63, %p64
    %p66 = scmp.ne.s32.totalorder %s58, %s61
    %p67 = scmp.eq.s32.totalorder %s8, 0
    %p68 = por %p66, %p67
    %p69 = scmp.ne.s32.totalorder %s58, %s61
    %p70 = scmp.eq.s32.totalorder %s13, 1
    %p71 = por %p69, %p70
    %p72 = scmp.ne.s32.totalorder %s61, %s62
    %p73 = scmp.eq.s32.totalorder %s13, 0
    %p74 = por %p72, %p73
    %p75 = scmp.ne.s32.totalorder %s61, %s62
    %p76 = scmp.eq.s32.totalorder %s14, 1
    %p77 = por %p75, %p76
    %p79 = scmp.ne.s32.totalorder %s62, %s78
    %p80 = scmp.eq.s32.totalorder %s14, 0
    %p81 = por %p79, %p80
    %s82 = ssub.s32 %s15, %s27
    %s83 = ssub.s32 %s16, %s23
    %s84 = sor.u32 %s82, %s83
    %p85 = scmp.eq.s32.totalorder %s84, 0
    %s87 = sadd.s32 %s86, 1
    %s88 = scalar_select %p85, %s86, %s87
    %p91 = pneg %p85
    %p92 = scmp.eq.s32.totalorder %s8, 1
    %p93 = por %p91, %p92
    %p94 = scmp.ne.s32.totalorder %s86, %s89
    %p95 = scmp.eq.s32.totalorder %s8, 0
    %p96 = por %p94, %p95
    %p97 = scmp.ne.s32.totalorder %s86, %s89
    %p98 = scmp.eq.s32.totalorder %s13, 1
    %p99 = por %p97, %p98
    %p100 = scmp.ne.s32.totalorder %s89, %s90
    %p101 = scmp.eq.s32.totalorder %s13, 0
    %p102 = por %p100, %p101
    %p103 = scmp.ne.s32.totalorder %s89, %s90
    %p104 = scmp.eq.s32.totalorder %s14, 1
    %p105 = por %p103, %p104
    %p107 = scmp.ne.s32.totalorder %s90, %s106
    %p108 = scmp.eq.s32.totalorder %s14, 0
    %p109 = por %p107, %p108
    %p110 = scmp.le.s32.totalorder 1, %s8
    %p111 = scmp.lt.s32.totalorder %s8, 3
    %p112 = pnand %p110, %p111
    %p113 = pneg %p112
    // Predicated region
    $region9: #{spectral_conv2d_forward.4} parent=5 // pred_check
      _
    $region10: #{spectral_conv2d_forward.4} parent=5 // pred_check_branch
      %115 = sbr.rel (%p112) target = $region12
    $region11: #{spectral_conv2d_forward.4} parent=5 // pred_region
      %s116 = ssub.s32 %s8, 1
    $region12: #{spectral_conv2d_forward.4} parent=5 // pred_fallthru
      _
    %p117 = scmp.lt.s32.totalorder %s8, 2
    // Predicated region
    $region13: #{spectral_conv2d_forward.4} parent=5 // pred_check
      %p118 = pneg %p117
    $region14: #{spectral_conv2d_forward.4} parent=5 // pred_check_branch
      %120 = sbr.rel (%p118) target = $region16
    $region15: #{spectral_conv2d_forward.4} parent=5 // pred_region
      // Predicated region
      $region17: #{spectral_conv2d_forward.4} parent=15 // pred_check
        %p121 = pneg %p42
      $region18: #{spectral_conv2d_forward.4} parent=15 // pred_check_branch
        %123 = sbr.rel (%p121) target = $region20
      $region19: #{spectral_conv2d_forward.4} parent=15 // pred_region
        %s124 = smul.u32 4, %s15
        %p125 = scmp.lt.s32.totalorder %s124, 7
        %s126 = scalar_select %p125, %s124, 7
        %p127 = scmp.lt.s32.totalorder %s16, 0
        %s128 = scalar_select %p127, %s16, 0
        %s129 = smul.addr %s126, 2
        %s130 = sadd.s32 %s128, %s129
        %s131 = smul.addr %s130, 4
        %s132 = scalar_lea.vmem %s0, %s131
        %s133 = smul.u32 4, %s15
      $region20: #{spectral_conv2d_forward.4} parent=15 // pred_fallthru
        _
      // Predicated region
      $region21: #{spectral_conv2d_forward.4} parent=15 // pred_check
        %p134 = pneg %p68
      $region22: #{spectral_conv2d_forward.4} parent=15 // pred_check_branch
        %136 = sbr.rel (%p134) target = $region24
      $region23: #{spectral_conv2d_forward.4} parent=15 // pred_region
        %s137 = smul.u32 4, %s15
        %p138 = scmp.lt.s32.totalorder %s137, 7
        %s139 = scalar_select %p138, %s137, 7
        %s140 = smul.addr %s139, 2
        %s141 = smul.addr %s140, 4
        %s142 = scalar_lea.vmem %s1, %s141
        %s143 = smul.u32 4, %s15
      $region24: #{spectral_conv2d_forward.4} parent=15 // pred_fallthru
        _
    $region16: #{spectral_conv2d_forward.4} parent=5 // pred_fallthru
      _
    %p144 = scmp.le.s32.totalorder 1, %s8
    %p145 = scmp.lt.s32.totalorder %s8, 3
    %p146 = pnand %p144, %p145
    %p147 = pneg %p146
    // Predicated region
    $region25: #{spectral_conv2d_forward.4} parent=5 // pred_check
      _
    $region26: #{spectral_conv2d_forward.4} parent=5 // pred_check_branch
      %149 = sbr.rel (%p146) target = $region28
    $region27: #{spectral_conv2d_forward.4} parent=5 // pred_region
      %s150 = ssub.s32 %s8, 1
      %s151 = smul.u32 4, %s17
      %p152 = scmp.lt.s32.totalorder %s151, 7
      %s153 = scalar_select %p152, %s151, 7
      %p154 = scmp.lt.s32.totalorder %s18, 0
      %s155 = scalar_select %p154, %s18, 0
      %s156 = smul.addr %s153, 2
      %s157 = sadd.s32 %s155, %s156
      %s158 = smul.addr %s157, 4
      %s159 = scalar_lea.vmem %s0, %s158
      %p160 = pneg %p48
      %p161 = pneg %p45
      %s162 = smul.u32 4, %s17
      %p163 = scmp.lt.s32.totalorder %s162, 7
      %s164 = scalar_select %p163, %s162, 7
      %s165 = smul.addr %s164, 2
      %s166 = smul.addr %s165, 4
      %s167 = scalar_lea.vmem %s1, %s166
      %p168 = pneg %p74
      %p169 = pneg %p71
      %p170 = pneg %p102
      %p171 = pneg %p99
      %s172 = smul.u32 4, %s17
      %p173 = scmp.lt.s32.totalorder %s172, 7
      %s174 = scalar_select %p173, %s172, 7
      %p175 = scmp.lt.s32.totalorder %s18, 0
      %s176 = scalar_select %p175, %s18, 0
      %s177 = smul.addr %s174, 2
      %s178 = sadd.s32 %s176, %s177
      %s179 = smul.addr %s178, 4
      %s180 = scalar_lea.vmem %s2, %s179
      %s181 = smul.u32 4, %s17
      %p182 = scmp.lt.s32.totalorder %s181, 7
      %s183 = scalar_select %p182, %s181, 7
      %p184 = scmp.lt.s32.totalorder %s18, 0
      %s185 = scalar_select %p184, %s18, 0
      %s186 = smul.addr %s183, 2
      %s187 = sadd.s32 %s185, %s186
      %s188 = smul.addr %s187, 4
      %s189 = scalar_lea.vmem %s0, %s188
      %s190 = smul.u32 4, %s17
      %s191 = smul.u32 4, %s17
      %p192 = scmp.lt.s32.totalorder %s191, 7
      %s193 = scalar_select %p192, %s191, 7
      %s194 = smul.addr %s193, 2
      %s195 = smul.addr %s194, 4
      %s196 = scalar_lea.vmem %s1, %s195
      %s197 = smul.u32 4, %s17
      %s198 = smul.u32 4, %s17
      %p199 = scmp.lt.s32.totalorder %s198, 7
      %s200 = scalar_select %p199, %s198, 7
      %p201 = scmp.lt.s32.totalorder %s18, 0
      %s202 = scalar_select %p201, %s18, 0
      %s203 = smul.addr %s200, 2
      %s204 = sadd.s32 %s202, %s203
      %s205 = smul.addr %s204, 4
      %s206 = scalar_lea.vmem %s2, %s205
      %s207 = smul.u32 4, %s17
      %v209 = vld [vmem:[%s196] sm:$0xf]
      %v210 = vld [vmem:[%s196 + $0x4] sm:$0xf]
      %v211 = vld [vmem:[%s196 + $0x8] sm:$0xf]
      %v212 = vld [vmem:[%s196 + $0xc] sm:$0xf]
      %v213 = vld [vmem:[%s196 + $0x10] sm:$0xf]
      %v214 = vld [vmem:[%s196 + $0x14] sm:$0xf]
      %v215 = vld [vmem:[%s196 + $0x18] sm:$0xf]
      %v216 = vld [vmem:[%s196 + $0x1c] sm:$0xf]
      %v217 = vld [vmem:[%s189] sm:$0xf]
      %v218 = vld [vmem:[%s189 + $0x4] sm:$0xf]
      %v219 = vld [vmem:[%s189 + $0x8] sm:$0xf]
      %v220 = vld [vmem:[%s189 + $0xc] sm:$0xf]
      %v221 = vld [vmem:[%s189 + $0x10] sm:$0xf]
      %v222 = vld [vmem:[%s189 + $0x14] sm:$0xf]
      %v223 = vld [vmem:[%s189 + $0x18] sm:$0xf]
      %v224 = vld [vmem:[%s189 + $0x1c] sm:$0xf]
      %v227 = vunpack.c.l.b16 %v209
      %v228 = vunpack.c.l.b16 %v210
      %v229 = vpack.c.b16 %v228, %v227
      %v232 = vunpack.c.l.b16 %v217
      %v233 = vunpack.c.l.b16 %v218
      %v234 = vpack.c.b16 %v233, %v232
      %vm236 = vcmask 130048
      %v238 = vsel %vm236, %v229, 0
      %240 = vmatprep.subr.bf16.mxu0 0
      %241 = vmatpush1.bf16.msra.mxu0 %v234
      %242 = vmatprep.subr.bf16.mxu0 0
      %243 = vmatpush1.bf16.msra.mxu0 0
      %244 = vmatprep.subr.bf16.mxu0 0
      %245 = vmatpush1.bf16.msra.mxu0 0
      %246 = vmatprep.subr.bf16.mxu0 0
      %247 = vmatpush1.bf16.msra.mxu0 0
      %248 = vmatprep.subr.bf16.mxu0 0
      %249 = vmatpush1.bf16.msra.mxu0 0
      %250 = vmatprep.subr.bf16.mxu0 0
      %251 = vmatpush1.bf16.msra.mxu0 0
      %252 = vmatprep.subr.bf16.mxu0 0
      %253 = vmatpush1.bf16.msra.mxu0 0
      %254 = vmatprep.subr.bf16.mxu0 0
      %255 = vmatpush1.bf16.msra.mxu0 0
      %256 = vmatprep.subr.bf16.mxu0 0
      %257 = vmatpush1.bf16.msra.mxu0 0
      %258 = vmatprep.subr.bf16.mxu0 0
      %259 = vmatpush1.bf16.msra.mxu0 0
      %260 = vmatprep.subr.bf16.mxu0 0
      %261 = vmatpush1.bf16.msra.mxu0 0
      %262 = vmatprep.subr.bf16.mxu0 0
      %263 = vmatpush1.bf16.msra.mxu0 0
      %264 = vmatprep.subr.bf16.mxu0 0
      %265 = vmatpush1.bf16.msra.mxu0 0
      %266 = vmatprep.subr.bf16.mxu0 0
      %267 = vmatpush1.bf16.msra.mxu0 0
      %268 = vmatprep.subr.bf16.mxu0 0
      %269 = vmatpush1.bf16.msra.mxu0 0
      %270 = vmatprep.subr.bf16.mxu0 0
      %271 = vmatpush1.bf16.msra.mxu0 0
      %272 = vmatprep.mubr.bf16.mxu0 0
      %273 = vmatmul.mubr.bf16.gmra.mrb[0].mxu0 %v238
      %v274 = vpop.f32.mrb[0].mxu0
      %v275 = vadd.f32 0.0, %v274
      %v276 = vpop.f32.mrb[0].mxu0
      %v277 = vpop.f32.mrb[0].mxu0
      %v278 = vadd.f32 0.0, %v277
      %v279 = vpop.f32.mrb[0].mxu0
      %280 = vdwg.mxu0
      %v283 = vunpack.c.l.b16 %v211
      %v284 = vunpack.c.l.b16 %v212
      %v285 = vpack.c.b16 %v284, %v283
      %v288 = vunpack.c.l.b16 %v219
      %v289 = vunpack.c.l.b16 %v220
      %v290 = vpack.c.b16 %v289, %v288
      %v293 = vsel %vm236, %v285, 0
      %295 = vmatprep.subr.bf16.mxu0 0
      %296 = vmatpush1.bf16.msra.mxu0 %v290
      %297 = vmatprep.subr.bf16.mxu0 0
      %298 = vmatpush1.bf16.msra.mxu0 0
      %299 = vmatprep.subr.bf16.mxu0 0
      %300 = vmatpush1.bf16.msra.mxu0 0
      %301 = vmatprep.subr.bf16.mxu0 0
      %302 = vmatpush1.bf16.msra.mxu0 0
      %303 = vmatprep.subr.bf16.mxu0 0
      %304 = vmatpush1.bf16.msra.mxu0 0
      %305 = vmatprep.subr.bf16.mxu0 0
      %306 = vmatpush1.bf16.msra.mxu0 0
      %307 = vmatprep.subr.bf16.mxu0 0
      %308 = vmatpush1.bf16.msra.mxu0 0
      %309 = vmatprep.subr.bf16.mxu0 0
      %310 = vmatpush1.bf16.msra.mxu0 0
      %311 = vmatprep.subr.bf16.mxu0 0
      %312 = vmatpush1.bf16.msra.mxu0 0
      %313 = vmatprep.subr.bf16.mxu0 0
      %314 = vmatpush1.bf16.msra.mxu0 0
      %315 = vmatprep.subr.bf16.mxu0 0
      %316 = vmatpush1.bf16.msra.mxu0 0
      %317 = vmatprep.subr.bf16.mxu0 0
      %318 = vmatpush1.bf16.msra.mxu0 0
      %319 = vmatprep.subr.bf16.mxu0 0
      %320 = vmatpush1.bf16.msra.mxu0 0
      %321 = vmatprep.subr.bf16.mxu0 0
      %322 = vmatpush1.bf16.msra.mxu0 0
      %323 = vmatprep.subr.bf16.mxu0 0
      %324 = vmatpush1.bf16.msra.mxu0 0
      %325 = vmatprep.subr.bf16.mxu0 0
      %326 = vmatpush1.bf16.msra.mxu0 0
      %327 = vmatprep.mubr.bf16.mxu0 0
      %328 = vmatmul.mubr.bf16.gmra.mrb[0].mxu0 %v293
      %v329 = vpop.f32.mrb[0].mxu0
      %v330 = vadd.f32 0.0, %v329
      %v331 = vpop.f32.mrb[0].mxu0
      %v332 = vpop.f32.mrb[0].mxu0
      %v333 = vadd.f32 0.0, %v332
      %v334 = vpop.f32.mrb[0].mxu0
      %335 = vdwg.mxu0
      %v338 = vunpack.c.l.b16 %v213
      %v339 = vunpack.c.l.b16 %v214
      %v340 = vpack.c.b16 %v339, %v338
      %v343 = vunpack.c.l.b16 %v221
      %v344 = vunpack.c.l.b16 %v222
      %v345 = vpack.c.b16 %v344, %v343
      %v348 = vsel %vm236, %v340, 0
      %350 = vmatprep.subr.bf16.mxu0 0
      %351 = vmatpush1.bf16.msra.mxu0 %v345
      %352 = vmatprep.subr.bf16.mxu0 0
      %353 = vmatpush1.bf16.msra.mxu0 0
      %354 = vmatprep.subr.bf16.mxu0 0
      %355 = vmatpush1.bf16.msra.mxu0 0
      %356 = vmatprep.subr.bf16.mxu0 0
      %357 = vmatpush1.bf16.msra.mxu0 0
      %358 = vmatprep.subr.bf16.mxu0 0
      %359 = vmatpush1.bf16.msra.mxu0 0
      %360 = vmatprep.subr.bf16.mxu0 0
      %361 = vmatpush1.bf16.msra.mxu0 0
      %362 = vmatprep.subr.bf16.mxu0 0
      %363 = vmatpush1.bf16.msra.mxu0 0
      %364 = vmatprep.subr.bf16.mxu0 0
      %365 = vmatpush1.bf16.msra.mxu0 0
      %366 = vmatprep.subr.bf16.mxu0 0
      %367 = vmatpush1.bf16.msra.mxu0 0
      %368 = vmatprep.subr.bf16.mxu0 0
      %369 = vmatpush1.bf16.msra.mxu0 0
      %370 = vmatprep.subr.bf16.mxu0 0
      %371 = vmatpush1.bf16.msra.mxu0 0
      %372 = vmatprep.subr.bf16.mxu0 0
      %373 = vmatpush1.bf16.msra.mxu0 0
      %374 = vmatprep.subr.bf16.mxu0 0
      %375 = vmatpush1.bf16.msra.mxu0 0
      %376 = vmatprep.subr.bf16.mxu0 0
      %377 = vmatpush1.bf16.msra.mxu0 0
      %378 = vmatprep.subr.bf16.mxu0 0
      %379 = vmatpush1.bf16.msra.mxu0 0
      %380 = vmatprep.subr.bf16.mxu0 0
      %381 = vmatpush1.bf16.msra.mxu0 0
      %382 = vmatprep.mubr.bf16.mxu0 0
      %383 = vmatmul.mubr.bf16.gmra.mrb[0].mxu0 %v348
      %v384 = vpop.f32.mrb[0].mxu0
      %v385 = vadd.f32 0.0, %v384
      %v386 = vpop.f32.mrb[0].mxu0
      %v387 = vpop.f32.mrb[0].mxu0
      %v388 = vadd.f32 0.0, %v387
      %v389 = vpop.f32.mrb[0].mxu0
      %390 = vdwg.mxu0
      %v393 = vunpack.c.l.b16 %v215
      %v394 = vunpack.c.l.b16 %v216
      %v395 = vpack.c.b16 %v394, %v393
      %v398 = vunpack.c.l.b16 %v223
      %v399 = vunpack.c.l.b16 %v224
      %v400 = vpack.c.b16 %v399, %v398
      %v403 = vsel %vm236, %v395, 0
      %405 = vmatprep.subr.bf16.mxu0 0
      %406 = vmatpush1.bf16.msra.mxu0 %v400
      %407 = vmatprep.subr.bf16.mxu0 0
      %408 = vmatpush1.bf16.msra.mxu0 0
      %409 = vmatprep.subr.bf16.mxu0 0
      %410 = vmatpush1.bf16.msra.mxu0 0
      %411 = vmatprep.subr.bf16.mxu0 0
      %412 = vmatpush1.bf16.msra.mxu0 0
      %413 = vmatprep.subr.bf16.mxu0 0
      %414 = vmatpush1.bf16.msra.mxu0 0
      %415 = vmatprep.subr.bf16.mxu0 0
      %416 = vmatpush1.bf16.msra.mxu0 0
      %417 = vmatprep.subr.bf16.mxu0 0
      %418 = vmatpush1.bf16.msra.mxu0 0
      %419 = vmatprep.subr.bf16.mxu0 0
      %420 = vmatpush1.bf16.msra.mxu0 0
      %421 = vmatprep.subr.bf16.mxu0 0
      %422 = vmatpush1.bf16.msra.mxu0 0
      %423 = vmatprep.subr.bf16.mxu0 0
      %424 = vmatpush1.bf16.msra.mxu0 0
      %425 = vmatprep.subr.bf16.mxu0 0
      %426 = vmatpush1.bf16.msra.mxu0 0
      %427 = vmatprep.subr.bf16.mxu0 0
      %428 = vmatpush1.bf16.msra.mxu0 0
      %429 = vmatprep.subr.bf16.mxu0 0
      %430 = vmatpush1.bf16.msra.mxu0 0
      %431 = vmatprep.subr.bf16.mxu0 0
      %432 = vmatpush1.bf16.msra.mxu0 0
      %433 = vmatprep.subr.bf16.mxu0 0
      %434 = vmatpush1.bf16.msra.mxu0 0
      %435 = vmatprep.subr.bf16.mxu0 0
      %436 = vmatpush1.bf16.msra.mxu0 0
      %437 = vmatprep.mubr.bf16.mxu0 0
      %438 = vmatmul.mubr.bf16.gmra.mrb[0].mxu0 %v403
      %v439 = vpop.f32.mrb[0].mxu0
      %v440 = vadd.f32 0.0, %v439
      %v441 = vpop.f32.mrb[0].mxu0
      %v442 = vpop.f32.mrb[0].mxu0
      %v443 = vadd.f32 0.0, %v442
      %v444 = vpop.f32.mrb[0].mxu0
      %445 = vdwg.mxu0
      %v446 = vpack.c.bf16 %v278, %v275
      %v447 = vpack.c.bf16 %v333, %v330
      %v448 = vpack.c.bf16 %v388, %v385
      %v449 = vpack.c.bf16 %v443, %v440
      %v454 = vunpack.c.l.b16 %v446
      %v455 = vunpack.c.h.b16 %v446
      %v456 = vunpack.c.l.b16 %v447
      %v457 = vunpack.c.h.b16 %v447
      %v458 = vunpack.c.l.b16 %v448
      %v459 = vunpack.c.h.b16 %v448
      %v460 = vunpack.c.l.b16 %v449
      %v461 = vunpack.c.h.b16 %v449
      %v462 = vpack.c.b16 %v454, %v454
      %v463 = vpack.c.b16 %v455, %v455
      %v464 = vpack.c.b16 %v456, %v456
      %v465 = vpack.c.b16 %v457, %v457
      %v466 = vpack.c.b16 %v458, %v458
      %v467 = vpack.c.b16 %v459, %v459
      %v468 = vpack.c.b16 %v460, %v460
      %v469 = vpack.c.b16 %v461, %v461
      %478 = vst [vmem:[%s206] sm:$0xf] %v462
      %479 = vst [vmem:[%s206 + $0x4] sm:$0xf] %v463
      %480 = vst [vmem:[%s206 + $0x8] sm:$0xf] %v464
      %481 = vst [vmem:[%s206 + $0xc] sm:$0xf] %v465
      %482 = vst [vmem:[%s206 + $0x10] sm:$0xf] %v466
      %483 = vst [vmem:[%s206 + $0x14] sm:$0xf] %v467
      %484 = vst [vmem:[%s206 + $0x18] sm:$0xf] %v468
      %485 = vst [vmem:[%s206 + $0x1c] sm:$0xf] %v469
      %s486 = smul.u32 4, %s17
      %p487 = scmp.lt.s32.totalorder %s486, 7
      %s488 = scalar_select %p487, %s486, 7
      %p489 = scmp.lt.s32.totalorder %s18, 0
      %s490 = scalar_select %p489, %s18, 0
      %s491 = smul.addr %s488, 2
      %s492 = sadd.s32 %s490, %s491
      %s493 = smul.addr %s492, 4
      %s494 = scalar_lea.vmem %s2, %s493
      // Predicated region
      $region29: #{spectral_conv2d_forward.4} parent=27 // pred_check
        %p495 = pneg %p99
      $region30: #{spectral_conv2d_forward.4} parent=27 // pred_check_branch
        %497 = sbr.rel (%p495) target = $region32
      $region31: #{spectral_conv2d_forward.4} parent=27 // pred_region
        %s498 = smul.u32 4, %s17
      $region32: #{spectral_conv2d_forward.4} parent=27 // pred_fallthru
        _
    $region28: #{spectral_conv2d_forward.4} parent=5 // pred_fallthru
      _
    %p499 = scmp.le.s32.totalorder 2, %s8
    // Predicated region
    $region33: #{spectral_conv2d_forward.4} parent=5 // pred_check
      %p500 = pneg %p499
    $region34: #{spectral_conv2d_forward.4} parent=5 // pred_check_branch
      %502 = sbr.rel (%p500) target = $region36
    $region35: #{spectral_conv2d_forward.4} parent=5 // pred_region
      %s503 = ssub.s32 %s8, 2
      // Predicated region
      $region37: #{spectral_conv2d_forward.4} parent=35 // pred_check
        %p504 = pneg %p105
      $region38: #{spectral_conv2d_forward.4} parent=35 // pred_check_branch
        %506 = sbr.rel (%p504) target = $region40
      $region39: #{spectral_conv2d_forward.4} parent=35 // pred_region
        %s507 = smul.u32 4, %s19
        %p508 = scmp.lt.s32.totalorder %s507, 7
        %s509 = scalar_select %p508, %s507, 7
        %p510 = scmp.lt.s32.totalorder %s20, 0
        %s511 = scalar_select %p510, %s20, 0
        %s512 = smul.addr %s509, 2
        %s513 = sadd.s32 %s511, %s512
        %s514 = smul.addr %s513, 4
        %s515 = scalar_lea.vmem %s2, %s514
      $region40: #{spectral_conv2d_forward.4} parent=35 // pred_fallthru
        _
    $region36: #{spectral_conv2d_forward.4} parent=5 // pred_fallthru
      _
  $region6: #{spectral_conv2d_forward.4} parent=0 // loop_footer
    %s12 = sadd.s32 1, %s8
  $region7: #{spectral_conv2d_forward.4} parent=0 // loop_footer_branch
    %7 = sbr.rel target = $region3
  $region8: #{spectral_conv2d_forward.4} parent=0 // loop_exit
    _

// kernel: spectral_conv2d_forward.5
$region0: #{spectral_conv2d_forward.5}
  #allocation0 [shape = 'u32[]', space=smem, size = 0x4, offset = 0x4, fixed_abs, tag = 'smem constant byte address 0x4 - core index']
  #allocation1 [shape = 'u32[144,128]{1,0:T(1,128)}', space=vmem, size = 0x12000, scoped, tag = 'internal scratch']
  %s0 = inlined_call_operand.vmem [shape: f32[2,8,256], index: 0, kind: input, shape index: {}]
  %s1 = inlined_call_operand.vmem [shape: f32[2,8,256], index: 1, kind: input, shape index: {}]
  %s2 = inlined_call_operand.vmem [shape: bf16[16,8], index: 2, kind: input, shape index: {}]
  %s3 = inlined_call_operand.vmem [shape: f32[16,1], index: 3, kind: input, shape index: {}]
  %s4 = inlined_call_operand.vmem [shape: bf16[8,16], index: 4, kind: input, shape index: {}]
  %s5 = inlined_call_operand.vmem [shape: f32[8,1], index: 5, kind: input, shape index: {}]
  %s6 = inlined_call_operand.vmem [shape: bf16[16,8], index: 6, kind: input, shape index: {}]
  %s7 = inlined_call_operand.vmem [shape: f32[16,1], index: 7, kind: input, shape index: {}]
  %s8 = inlined_call_operand.vmem [shape: bf16[8,16], index: 8, kind: input, shape index: {}]
  %s9 = inlined_call_operand.vmem [shape: f32[8,1], index: 9, kind: input, shape index: {}]
  %s10 = inlined_call_operand.vmem [shape: f32[2,8,256], index: 10, kind: output, shape index: {0}]
  %s11 = inlined_call_operand.vmem [shape: f32[2,8,256], index: 11, kind: output, shape index: {1}]
  %12 = xla_tuple %s10, %s11
  %s13 = sld [smem:[#allocation0]]
  $region81: #{spectral_conv2d_forward.5} parent=0
    _
  %s15 = ssub.s32 1, %s13
  %s16 = scalar_select 0, %s15, %s13
  loop: start=0, step=1, limit=6
  $region2: #{spectral_conv2d_forward.5} parent=0 // loop_pre_header
    _
  $region3: #{spectral_conv2d_forward.5} parent=0 // loop_header
    %s18 = sphi 0, %s22
    %p19 = scmp.ge.s32.totalorder %s18, 6
    %s25 = sphi 0, %s37
    %s26 = sphi 0, %s33
    %s27 = sphi 0, %s25
    %s28 = sphi 0, %s26
    %s29 = sphi 0, %s27
    %s30 = sphi 0, %s28
    %s42 = sphi 0, %s44
    %s45 = sphi 0, %s42
    %s46 = sphi 0, %s45
    %s62 = sphi 0, %s46
    %s70 = sphi 0, %s72
    %s73 = sphi 0, %s70
    %s74 = sphi 0, %s73
    %s90 = sphi 0, %s74
    %s94 = sphi 0, %s94
    %s96 = sphi 0, %s94
    %s97 = sphi 0, %s96
    %s111 = sphi 0, %s97
    %s115 = sphi 0, %s115
    %s117 = sphi 0, %s115
    %s118 = sphi 0, %s117
    %s132 = sphi 0, %s118
    %s136 = sphi 0, %s136
    %s138 = sphi 0, %s136
    %s139 = sphi 0, %s138
    %s153 = sphi 0, %s139
    %s157 = sphi 0, %s157
    %s159 = sphi 0, %s157
    %s160 = sphi 0, %s159
    %s174 = sphi 0, %s160
    %s178 = sphi 0, %s178
    %s180 = sphi 0, %s178
    %s181 = sphi 0, %s180
    %s195 = sphi 0, %s181
    %s199 = sphi 0, %s199
    %s201 = sphi 0, %s199
    %s202 = sphi 0, %s201
    %s216 = sphi 0, %s202
    %s220 = sphi 0, %s220
    %s222 = sphi 0, %s220
    %s223 = sphi 0, %s222
    %s237 = sphi 0, %s223
    %s241 = sphi 0, %s241
    %s243 = sphi 0, %s241
    %s244 = sphi 0, %s243
    %s258 = sphi 0, %s244
    %s266 = sphi 0, %s268
    %s269 = sphi 0, %s266
    %s270 = sphi 0, %s269
    %s286 = sphi 0, %s270
    %s294 = sphi 0, %s296
    %s297 = sphi 0, %s294
    %s298 = sphi 0, %s297
    %s314 = sphi 0, %s298
  $region4: #{spectral_conv2d_forward.5} parent=0 // loop_header_branch
    %21 = sbr.rel (%p19) target = $region8
  $region5: #{spectral_conv2d_forward.5} parent=0 // loop_body
    %s23 = ssub.s32 %s18, 1
    %s24 = ssub.s32 %s18, 2
    %s31 = sadd.s32 1, %s26
    %p32 = scmp.ge.s32.totalorder %s31, 2
    %s33 = scalar_select %p32, 0, %s31
    %s34 = sadd.s32 1, %s25
    %s35 = scalar_select %p32, %s34, %s25
    %p36 = scmp.ge.s32.totalorder %s35, 2
    %s37 = scalar_select %p36, 0, %s35
    %s38 = ssub.s32 %s25, %s37
    %s39 = ssub.s32 %s26, %s33
    %s40 = sor.u32 %s38, %s39
    %p41 = scmp.eq.s32.totalorder %s40, 0
    %s43 = sadd.s32 %s42, 1
    %s44 = scalar_select %p41, %s42, %s43
    %p47 = pneg %p41
    %p48 = scmp.eq.s32.totalorder %s18, 3
    %p49 = por %p47, %p48
    %p50 = scmp.ne.s32.totalorder %s42, %s45
    %p51 = scmp.eq.s32.totalorder %s18, 0
    %p52 = por %p50, %p51
    %p53 = scmp.ne.s32.totalorder %s42, %s45
    %p54 = scmp.eq.s32.totalorder %s23, 3
    %p55 = por %p53, %p54
    %p56 = scmp.ne.s32.totalorder %s45, %s46
    %p57 = scmp.eq.s32.totalorder %s23, 0
    %p58 = por %p56, %p57
    %p59 = scmp.ne.s32.totalorder %s45, %s46
    %p60 = scmp.eq.s32.totalorder %s24, 3
    %p61 = por %p59, %p60
    %p63 = scmp.ne.s32.totalorder %s46, %s62
    %p64 = scmp.eq.s32.totalorder %s24, 0
    %p65 = por %p63, %p64
    %s66 = ssub.s32 %s25, %s37
    %s67 = ssub.s32 %s26, %s33
    %s68 = sor.u32 %s66, %s67
    %p69 = scmp.eq.s32.totalorder %s68, 0
    %s71 = sadd.s32 %s70, 1
    %s72 = scalar_select %p69, %s70, %s71
    %p75 = pneg %p69
    %p76 = scmp.eq.s32.totalorder %s18, 3
    %p77 = por %p75, %p76
    %p78 = scmp.ne.s32.totalorder %s70, %s73
    %p79 = scmp.eq.s32.totalorder %s18, 0
    %p80 = por %p78, %p79
    %p81 = scmp.ne.s32.totalorder %s70, %s73
    %p82 = scmp.eq.s32.totalorder %s23, 3
    %p83 = por %p81, %p82
    %p84 = scmp.ne.s32.totalorder %s73, %s74
    %p85 = scmp.eq.s32.totalorder %s23, 0
    %p86 = por %p84, %p85
    %p87 = scmp.ne.s32.totalorder %s73, %s74
    %p88 = scmp.eq.s32.totalorder %s24, 3
    %p89 = por %p87, %p88
    %p91 = scmp.ne.s32.totalorder %s74, %s90
    %p92 = scmp.eq.s32.totalorder %s24, 0
    %p93 = por %p91, %p92
    %s95 = sadd.s32 %s94, 1
    %p98 = scmp.eq.s32.totalorder %s18, 3
    %p99 = scmp.ne.s32.totalorder %s94, %s96
    %p100 = scmp.eq.s32.totalorder %s18, 0
    %p101 = por %p99, %p100
    %p102 = scmp.ne.s32.totalorder %s94, %s96
    %p103 = scmp.eq.s32.totalorder %s23, 3
    %p104 = por %p102, %p103
    %p105 = scmp.ne.s32.totalorder %s96, %s97
    %p106 = scmp.eq.s32.totalorder %s23, 0
    %p107 = por %p105, %p106
    %p108 = scmp.ne.s32.totalorder %s96, %s97
    %p109 = scmp.eq.s32.totalorder %s24, 3
    %p110 = por %p108, %p109
    %p112 = scmp.ne.s32.totalorder %s97, %s111
    %p113 = scmp.eq.s32.totalorder %s24, 0
    %p114 = por %p112, %p113
    %s116 = sadd.s32 %s115, 1
    %p119 = scmp.eq.s32.totalorder %s18, 3
    %p120 = scmp.ne.s32.totalorder %s115, %s117
    %p121 = scmp.eq.s32.totalorder %s18, 0
    %p122 = por %p120, %p121
    %p123 = scmp.ne.s32.totalorder %s115, %s117
    %p124 = scmp.eq.s32.totalorder %s23, 3
    %p125 = por %p123, %p124
    %p126 = scmp.ne.s32.totalorder %s117, %s118
    %p127 = scmp.eq.s32.totalorder %s23, 0
    %p128 = por %p126, %p127
    %p129 = scmp.ne.s32.totalorder %s117, %s118
    %p130 = scmp.eq.s32.totalorder %s24, 3
    %p131 = por %p129, %p130
    %p133 = scmp.ne.s32.totalorder %s118, %s132
    %p134 = scmp.eq.s32.totalorder %s24, 0
    %p135 = por %p133, %p134
    %s137 = sadd.s32 %s136, 1
    %p140 = scmp.eq.s32.totalorder %s18, 3
    %p141 = scmp.ne.s32.totalorder %s136, %s138
    %p142 = scmp.eq.s32.totalorder %s18, 0
    %p143 = por %p141, %p142
    %p144 = scmp.ne.s32.totalorder %s136, %s138
    %p145 = scmp.eq.s32.totalorder %s23, 3
    %p146 = por %p144, %p145
    %p147 = scmp.ne.s32.totalorder %s138, %s139
    %p148 = scmp.eq.s32.totalorder %s23, 0
    %p149 = por %p147, %p148
    %p150 = scmp.ne.s32.totalorder %s138, %s139
    %p151 = scmp.eq.s32.totalorder %s24, 3
    %p152 = por %p150, %p151
    %p154 = scmp.ne.s32.totalorder %s139, %s153
    %p155 = scmp.eq.s32.totalorder %s24, 0
    %p156 = por %p154, %p155
    %s158 = sadd.s32 %s157, 1
    %p161 = scmp.eq.s32.totalorder %s18, 3
    %p162 = scmp.ne.s32.totalorder %s157, %s159
    %p163 = scmp.eq.s32.totalorder %s18, 0
    %p164 = por %p162, %p163
    %p165 = scmp.ne.s32.totalorder %s157, %s159
    %p166 = scmp.eq.s32.totalorder %s23, 3
    %p167 = por %p165, %p166
    %p168 = scmp.ne.s32.totalorder %s159, %s160
    %p169 = scmp.eq.s32.totalorder %s23, 0
    %p170 = por %p168, %p169
    %p171 = scmp.ne.s32.totalorder %s159, %s160
    %p172 = scmp.eq.s32.totalorder %s24, 3
    %p173 = por %p171, %p172
    %p175 = scmp.ne.s32.totalorder %s160, %s174
    %p176 = scmp.eq.s32.totalorder %s24, 0
    %p177 = por %p175, %p176
    %s179 = sadd.s32 %s178, 1
    %p182 = scmp.eq.s32.totalorder %s18, 3
    %p183 = scmp.ne.s32.totalorder %s178, %s180
    %p184 = scmp.eq.s32.totalorder %s18, 0
    %p185 = por %p183, %p184
    %p186 = scmp.ne.s32.totalorder %s178, %s180
    %p187 = scmp.eq.s32.totalorder %s23, 3
    %p188 = por %p186, %p187
    %p189 = scmp.ne.s32.totalorder %s180, %s181
    %p190 = scmp.eq.s32.totalorder %s23, 0
    %p191 = por %p189, %p190
    %p192 = scmp.ne.s32.totalorder %s180, %s181
    %p193 = scmp.eq.s32.totalorder %s24, 3
    %p194 = por %p192, %p193
    %p196 = scmp.ne.s32.totalorder %s181, %s195
    %p197 = scmp.eq.s32.totalorder %s24, 0
    %p198 = por %p196, %p197
    %s200 = sadd.s32 %s199, 1
    %p203 = scmp.eq.s32.totalorder %s18, 3
    %p204 = scmp.ne.s32.totalorder %s199, %s201
    %p205 = scmp.eq.s32.totalorder %s18, 0
    %p206 = por %p204, %p205
    %p207 = scmp.ne.s32.totalorder %s199, %s201
    %p208 = scmp.eq.s32.totalorder %s23, 3
    %p209 = por %p207, %p208
    %p210 = scmp.ne.s32.totalorder %s201, %s202
    %p211 = scmp.eq.s32.totalorder %s23, 0
    %p212 = por %p210, %p211
    %p213 = scmp.ne.s32.totalorder %s201, %s202
    %p214 = scmp.eq.s32.totalorder %s24, 3
    %p215 = por %p213, %p214
    %p217 = scmp.ne.s32.totalorder %s202, %s216
    %p218 = scmp.eq.s32.totalorder %s24, 0
    %p219 = por %p217, %p218
    %s221 = sadd.s32 %s220, 1
    %p224 = scmp.eq.s32.totalorder %s18, 3
    %p225 = scmp.ne.s32.totalorder %s220, %s222
    %p226 = scmp.eq.s32.totalorder %s18, 0
    %p227 = por %p225, %p226
    %p228 = scmp.ne.s32.totalorder %s220, %s222
    %p229 = scmp.eq.s32.totalorder %s23, 3
    %p230 = por %p228, %p229
    %p231 = scmp.ne.s32.totalorder %s222, %s223
    %p232 = scmp.eq.s32.totalorder %s23, 0
    %p233 = por %p231, %p232
    %p234 = scmp.ne.s32.totalorder %s222, %s223
    %p235 = scmp.eq.s32.totalorder %s24, 3
    %p236 = por %p234, %p235
    %p238 = scmp.ne.s32.totalorder %s223, %s237
    %p239 = scmp.eq.s32.totalorder %s24, 0
    %p240 = por %p238, %p239
    %s242 = sadd.s32 %s241, 1
    %p245 = scmp.eq.s32.totalorder %s18, 3
    %p246 = scmp.ne.s32.totalorder %s241, %s243
    %p247 = scmp.eq.s32.totalorder %s18, 0
    %p248 = por %p246, %p247
    %p249 = scmp.ne.s32.totalorder %s241, %s243
    %p250 = scmp.eq.s32.totalorder %s23, 3
    %p251 = por %p249, %p250
    %p252 = scmp.ne.s32.totalorder %s243, %s244
    %p253 = scmp.eq.s32.totalorder %s23, 0
    %p254 = por %p252, %p253
    %p255 = scmp.ne.s32.totalorder %s243, %s244
    %p256 = scmp.eq.s32.totalorder %s24, 3
    %p257 = por %p255, %p256
    %p259 = scmp.ne.s32.totalorder %s244, %s258
    %p260 = scmp.eq.s32.totalorder %s24, 0
    %p261 = por %p259, %p260
    %s262 = ssub.s32 %s25, %s37
    %s263 = ssub.s32 %s26, %s33
    %s264 = sor.u32 %s262, %s263
    %p265 = scmp.eq.s32.totalorder %s264, 0
    %s267 = sadd.s32 %s266, 1
    %s268 = scalar_select %p265, %s266, %s267
    %p271 = pneg %p265
    %p272 = scmp.eq.s32.totalorder %s18, 3
    %p273 = por %p271, %p272
    %p274 = scmp.ne.s32.totalorder %s266, %s269
    %p275 = scmp.eq.s32.totalorder %s18, 0
    %p276 = por %p274, %p275
    %p277 = scmp.ne.s32.totalorder %s266, %s269
    %p278 = scmp.eq.s32.totalorder %s23, 3
    %p279 = por %p277, %p278
    %p280 = scmp.ne.s32.totalorder %s269, %s270
    %p281 = scmp.eq.s32.totalorder %s23, 0
    %p282 = por %p280, %p281
    %p283 = scmp.ne.s32.totalorder %s269, %s270
    %p284 = scmp.eq.s32.totalorder %s24, 3
    %p285 = por %p283, %p284
    %p287 = scmp.ne.s32.totalorder %s270, %s286
    %p288 = scmp.eq.s32.totalorder %s24, 0
    %p289 = por %p287, %p288
    %s290 = ssub.s32 %s25, %s37
    %s291 = ssub.s32 %s26, %s33
    %s292 = sor.u32 %s290, %s291
    %p293 = scmp.eq.s32.totalorder %s292, 0
    %s295 = sadd.s32 %s294, 1
    %s296 = scalar_select %p293, %s294, %s295
    %p299 = pneg %p293
    %p300 = scmp.eq.s32.totalorder %s18, 3
    %p301 = por %p299, %p300
    %p302 = scmp.ne.s32.totalorder %s294, %s297
    %p303 = scmp.eq.s32.totalorder %s18, 0
    %p304 = por %p302, %p303
    %p305 = scmp.ne.s32.totalorder %s294, %s297
    %p306 = scmp.eq.s32.totalorder %s23, 3
    %p307 = por %p305, %p306
    %p308 = scmp.ne.s32.totalorder %s297, %s298
    %p309 = scmp.eq.s32.totalorder %s23, 0
    %p310 = por %p308, %p309
    %p311 = scmp.ne.s32.totalorder %s297, %s298
    %p312 = scmp.eq.s32.totalorder %s24, 3
    %p313 = por %p311, %p312
    %p315 = scmp.ne.s32.totalorder %s298, %s314
    %p316 = scmp.eq.s32.totalorder %s24, 0
    %p317 = por %p315, %p316
    %p318 = scmp.le.s32.totalorder 1, %s18
    %p319 = scmp.lt.s32.totalorder %s18, 5
    %p320 = pnand %p318, %p319
    %p321 = pneg %p320
    // Predicated region
    $region9: #{spectral_conv2d_forward.5} parent=5 // pred_check
      _
    $region10: #{spectral_conv2d_forward.5} parent=5 // pred_check_branch
      %323 = sbr.rel (%p320) target = $region12
    $region11: #{spectral_conv2d_forward.5} parent=5 // pred_region
      %s324 = ssub.s32 %s18, 1
      // Predicated region
      $region13: #{spectral_conv2d_forward.5} parent=11 // pred_check
        %p325 = pneg %p107
      $region14: #{spectral_conv2d_forward.5} parent=11 // pred_check_branch
        %327 = sbr.rel (%p325) target = $region16
      $region15: #{spectral_conv2d_forward.5} parent=11 // pred_region
        _
      $region16: #{spectral_conv2d_forward.5} parent=11 // pred_fallthru
        _
      // Predicated region
      $region17: #{spectral_conv2d_forward.5} parent=11 // pred_check
        %p328 = pneg %p128
      $region18: #{spectral_conv2d_forward.5} parent=11 // pred_check_branch
        %330 = sbr.rel (%p328) target = $region20
      $region19: #{spectral_conv2d_forward.5} parent=11 // pred_region
        _
      $region20: #{spectral_conv2d_forward.5} parent=11 // pred_fallthru
        _
      // Predicated region
      $region21: #{spectral_conv2d_forward.5} parent=11 // pred_check
        %p331 = pneg %p149
      $region22: #{spectral_conv2d_forward.5} parent=11 // pred_check_branch
        %333 = sbr.rel (%p331) target = $region24
      $region23: #{spectral_conv2d_forward.5} parent=11 // pred_region
        _
      $region24: #{spectral_conv2d_forward.5} parent=11 // pred_fallthru
        _
      // Predicated region
      $region25: #{spectral_conv2d_forward.5} parent=11 // pred_check
        %p334 = pneg %p170
      $region26: #{spectral_conv2d_forward.5} parent=11 // pred_check_branch
        %336 = sbr.rel (%p334) target = $region28
      $region27: #{spectral_conv2d_forward.5} parent=11 // pred_region
        _
      $region28: #{spectral_conv2d_forward.5} parent=11 // pred_fallthru
        _
      // Predicated region
      $region29: #{spectral_conv2d_forward.5} parent=11 // pred_check
        %p337 = pneg %p191
      $region30: #{spectral_conv2d_forward.5} parent=11 // pred_check_branch
        %339 = sbr.rel (%p337) target = $region32
      $region31: #{spectral_conv2d_forward.5} parent=11 // pred_region
        _
      $region32: #{spectral_conv2d_forward.5} parent=11 // pred_fallthru
        _
      // Predicated region
      $region33: #{spectral_conv2d_forward.5} parent=11 // pred_check
        %p340 = pneg %p212
      $region34: #{spectral_conv2d_forward.5} parent=11 // pred_check_branch
        %342 = sbr.rel (%p340) target = $region36
      $region35: #{spectral_conv2d_forward.5} parent=11 // pred_region
        _
      $region36: #{spectral_conv2d_forward.5} parent=11 // pred_fallthru
        _
      // Predicated region
      $region37: #{spectral_conv2d_forward.5} parent=11 // pred_check
        %p343 = pneg %p233
      $region38: #{spectral_conv2d_forward.5} parent=11 // pred_check_branch
        %345 = sbr.rel (%p343) target = $region40
      $region39: #{spectral_conv2d_forward.5} parent=11 // pred_region
        _
      $region40: #{spectral_conv2d_forward.5} parent=11 // pred_fallthru
        _
      // Predicated region
      $region41: #{spectral_conv2d_forward.5} parent=11 // pred_check
        %p346 = pneg %p254
      $region42: #{spectral_conv2d_forward.5} parent=11 // pred_check_branch
        %348 = sbr.rel (%p346) target = $region44
      $region43: #{spectral_conv2d_forward.5} parent=11 // pred_region
        _
      $region44: #{spectral_conv2d_forward.5} parent=11 // pred_fallthru
        _
    $region12: #{spectral_conv2d_forward.5} parent=5 // pred_fallthru
      _
    %p349 = scmp.lt.s32.totalorder %s18, 4
    // Predicated region
    $region45: #{spectral_conv2d_forward.5} parent=5 // pred_check
      %p350 = pneg %p349
    $region46: #{spectral_conv2d_forward.5} parent=5 // pred_check_branch
      %352 = sbr.rel (%p350) target = $region48
    $region47: #{spectral_conv2d_forward.5} parent=5 // pred_region
      // Predicated region
      $region49: #{spectral_conv2d_forward.5} parent=47 // pred_check
        %p353 = pneg %p52
      $region50: #{spectral_conv2d_forward.5} parent=47 // pred_check_branch
        %355 = sbr.rel (%p353) target = $region52
      $region51: #{spectral_conv2d_forward.5} parent=47 // pred_region
        %p356 = scmp.lt.s32.totalorder %s25, 1
        %s357 = scalar_select %p356, %s25, 1
        %p358 = scmp.lt.s32.totalorder %s26, 1
        %s359 = scalar_select %p358, %s26, 1
        %s360 = smul.addr %s357, 2
        %s361 = sadd.s32 %s359, %s360
        %s362 = smul.addr %s361, 8
        %s363 = scalar_lea.vmem %s0, %s362
      $region52: #{spectral_conv2d_forward.5} parent=47 // pred_fallthru
        _
      // Predicated region
      $region53: #{spectral_conv2d_forward.5} parent=47 // pred_check
        %p364 = pneg %p80
      $region54: #{spectral_conv2d_forward.5} parent=47 // pred_check_branch
        %366 = sbr.rel (%p364) target = $region56
      $region55: #{spectral_conv2d_forward.5} parent=47 // pred_region
        %p367 = scmp.lt.s32.totalorder %s25, 1
        %s368 = scalar_select %p367, %s25, 1
        %p369 = scmp.lt.s32.totalorder %s26, 1
        %s370 = scalar_select %p369, %s26, 1
        %s371 = smul.addr %s368, 2
        %s372 = sadd.s32 %s370, %s371
        %s373 = smul.addr %s372, 8
        %s374 = scalar_lea.vmem %s1, %s373
      $region56: #{spectral_conv2d_forward.5} parent=47 // pred_fallthru
        _
    $region48: #{spectral_conv2d_forward.5} parent=5 // pred_fallthru
      _
    %p375 = scmp.le.s32.totalorder 1, %s18
    %p376 = scmp.lt.s32.totalorder %s18, 5
    %p377 = pnand %p375, %p376
    %p378 = pneg %p377
    // Predicated region
    $region57: #{spectral_conv2d_forward.5} parent=5 // pred_check
      _
    $region58: #{spectral_conv2d_forward.5} parent=5 // pred_check_branch
      %380 = sbr.rel (%p377) target = $region60
    $region59: #{spectral_conv2d_forward.5} parent=5 // pred_region
      %s381 = ssub.s32 %s18, 1
      %p382 = scmp.lt.s32.totalorder %s27, 1
      %s383 = scalar_select %p382, %s27, 1
      %p384 = scmp.lt.s32.totalorder %s28, 1
      %s385 = scalar_select %p384, %s28, 1
      %s386 = smul.addr %s383, 2
      %s387 = sadd.s32 %s385, %s386
      %s388 = smul.addr %s387, 8
      %s389 = scalar_lea.vmem %s0, %s388
      %p390 = pneg %p58
      %p391 = pneg %p55
      %p392 = scmp.lt.s32.totalorder %s27, 1
      %s393 = scalar_select %p392, %s27, 1
      %p394 = scmp.lt.s32.totalorder %s28, 1
      %s395 = scalar_select %p394, %s28, 1
      %s396 = smul.addr %s393, 2
      %s397 = sadd.s32 %s395, %s396
      %s398 = smul.addr %s397, 8
      %s399 = scalar_lea.vmem %s1, %s398
      %p400 = pneg %p86
      %p401 = pneg %p83
      %p402 = pneg %p107
      %p403 = pneg %p104
      %p404 = pneg %p128
      %p405 = pneg %p125
      %p406 = pneg %p149
      %p407 = pneg %p146
      %p408 = pneg %p170
      %p409 = pneg %p167
      %p410 = pneg %p191
      %p411 = pneg %p188
      %p412 = pneg %p212
      %p413 = pneg %p209
      %p414 = pneg %p233
      %p415 = pneg %p230
      %p416 = pneg %p254
      %p417 = pneg %p251
      %p418 = pneg %p282
      %p419 = pneg %p279
      %p420 = scmp.lt.s32.totalorder %s27, 1
      %s421 = scalar_select %p420, %s27, 1
      %p422 = scmp.lt.s32.totalorder %s28, 1
      %s423 = scalar_select %p422, %s28, 1
      %s424 = smul.addr %s421, 2
      %s425 = sadd.s32 %s423, %s424
      %s426 = smul.addr %s425, 8
      %s427 = scalar_lea.vmem %s10, %s426
      %p428 = pneg %p310
      %p429 = pneg %p307
      %p430 = scmp.lt.s32.totalorder %s27, 1
      %s431 = scalar_select %p430, %s27, 1
      %p432 = scmp.lt.s32.totalorder %s28, 1
      %s433 = scalar_select %p432, %s28, 1
      %s434 = smul.addr %s431, 2
      %s435 = sadd.s32 %s433, %s434
      %s436 = smul.addr %s435, 8
      %s437 = scalar_lea.vmem %s11, %s436
      %p438 = scmp.lt.s32.totalorder %s27, 1
      %s439 = scalar_select %p438, %s27, 1
      %p440 = scmp.lt.s32.totalorder %s28, 1
      %s441 = scalar_select %p440, %s28, 1
      %s442 = smul.addr %s439, 2
      %s443 = sadd.s32 %s441, %s442
      %s444 = smul.addr %s443, 8
      %s445 = scalar_lea.vmem %s0, %s444
      %p446 = scmp.lt.s32.totalorder %s27, 1
      %s447 = scalar_select %p446, %s27, 1
      %p448 = scmp.lt.s32.totalorder %s28, 1
      %s449 = scalar_select %p448, %s28, 1
      %s450 = smul.addr %s447, 2
      %s451 = sadd.s32 %s449, %s450
      %s452 = smul.addr %s451, 8
      %s453 = scalar_lea.vmem %s1, %s452
      %p454 = scmp.lt.s32.totalorder %s27, 1
      %s455 = scalar_select %p454, %s27, 1
      %p456 = scmp.lt.s32.totalorder %s28, 1
      %s457 = scalar_select %p456, %s28, 1
      %s458 = smul.addr %s455, 2
      %s459 = sadd.s32 %s457, %s458
      %s460 = smul.addr %s459, 8
      %s461 = scalar_lea.vmem %s10, %s460
      %p462 = scmp.lt.s32.totalorder %s27, 1
      %s463 = scalar_select %p462, %s27, 1
      %p464 = scmp.lt.s32.totalorder %s28, 1
      %s465 = scalar_select %p464, %s28, 1
      %s466 = smul.addr %s463, 2
      %s467 = sadd.s32 %s465, %s466
      %s468 = smul.addr %s467, 8
      %s469 = scalar_lea.vmem %s11, %s468
      %v471 = vld [vmem:[%s445] sm:$0xff]
      %v472 = vld [vmem:[%s453] sm:$0xff]
      %v473 = vadd.f32 %v471, %v472
      %v474 = vpack.c.bf16 %v473, %v473
      %v475 = vld [vmem:[%s2] sm:$0xf]
      %v476 = vld [vmem:[%s2 + $0x4] sm:$0xf]
      %v477 = vld [vmem:[%s3] sm:$0xff]
      %v478 = vld [vmem:[%s3 + $0x8] sm:$0xff]
      %480 = vset.pattern.permute.xlu0 0
      %481 = vperm.xlu0 %480, %v477
      %v482 = vpop.permute.xlu0 %481
      %485 = vset.pattern.permute.xlu0 0
      %486 = vperm.xlu0 %485, %v478
      %v487 = vpop.permute.xlu0 %486
      %v491 = vunpack.c.l.b16 %v475
      %v492 = vunpack.c.l.b16 %v476
      %v493 = vpack.c.b16 %v492, %v491
      %vm494 = vcmask 64512
      %v496 = vsel %vm494, %v493, 0
      %vm498 = vcmask 1043456
      %v500 = vsel %vm498, %v474, 0
      %502 = vmatprep.subr.bf16.mxu0 0
      %503 = vmatpush1.bf16.msra.mxu0 %v500
      %504 = vmatprep.subr.bf16.mxu0 0
      %505 = vmatpush1.bf16.msra.mxu0 0
      %506 = vmatprep.subr.bf16.mxu0 0
      %507 = vmatpush1.bf16.msra.mxu0 0
      %508 = vmatprep.subr.bf16.mxu0 0
      %509 = vmatpush1.bf16.msra.mxu0 0
      %510 = vmatprep.subr.bf16.mxu0 0
      %511 = vmatpush1.bf16.msra.mxu0 0
      %512 = vmatprep.subr.bf16.mxu0 0
      %513 = vmatpush1.bf16.msra.mxu0 0
      %514 = vmatprep.subr.bf16.mxu0 0
      %515 = vmatpush1.bf16.msra.mxu0 0
      %516 = vmatprep.subr.bf16.mxu0 0
      %517 = vmatpush1.bf16.msra.mxu0 0
      %518 = vmatprep.subr.bf16.mxu0 0
      %519 = vmatpush1.bf16.msra.mxu0 0
      %520 = vmatprep.subr.bf16.mxu0 0
      %521 = vmatpush1.bf16.msra.mxu0 0
      %522 = vmatprep.subr.bf16.mxu0 0
      %523 = vmatpush1.bf16.msra.mxu0 0
      %524 = vmatprep.subr.bf16.mxu0 0
      %525 = vmatpush1.bf16.msra.mxu0 0
      %526 = vmatprep.subr.bf16.mxu0 0
      %527 = vmatpush1.bf16.msra.mxu0 0
      %528 = vmatprep.subr.bf16.mxu0 0
      %529 = vmatpush1.bf16.msra.mxu0 0
      %530 = vmatprep.subr.bf16.mxu0 0
      %531 = vmatpush1.bf16.msra.mxu0 0
      %532 = vmatprep.subr.bf16.mxu0 0
      %533 = vmatpush1.bf16.msra.mxu0 0
      %534 = vmatprep.mubr.bf16.mxu0 0
      %535 = vmatmul.mubr.bf16.gmra.mrb[0].mxu0 %v496
      %v536 = vpop.f32.mrb[0].mxu0
      %v537 = vadd.f32 %v482, %v536
      %v538 = vpop.f32.mrb[0].mxu0
      %v539 = vpop.f32.mrb[0].mxu0
      %v540 = vadd.f32 %v487, %v539
      %v541 = vpop.f32.mrb[0].mxu0
      %542 = vdwg.mxu0
      %v543 = vmax.f32 %v537, 0.0
      %v544 = vmax.f32 %v540, 0.0
      %v545 = vpack.c.bf16 %v544, %v543
      %v546 = vld [vmem:[%s4] sm:$0xf]
      %v547 = vld [vmem:[%s5] sm:$0xff]
      %549 = vset.pattern.permute.xlu0 0
      %550 = vperm.xlu0 %549, %v547
      %v551 = vpop.permute.xlu0 %550
      %vm553 = vcmask 130048
      %v555 = vsel %vm553, %v546, 0
      %557 = vmatprep.subr.bf16.mxu0 0
      %558 = vmatpush1.bf16.msra.mxu0 %v545
      %559 = vmatprep.subr.bf16.mxu0 0
      %560 = vmatpush1.bf16.msra.mxu0 0
      %561 = vmatprep.subr.bf16.mxu0 0
      %562 = vmatpush1.bf16.msra.mxu0 0
      %563 = vmatprep.subr.bf16.mxu0 0
      %564 = vmatpush1.bf16.msra.mxu0 0
      %565 = vmatprep.subr.bf16.mxu0 0
      %566 = vmatpush1.bf16.msra.mxu0 0
      %567 = vmatprep.subr.bf16.mxu0 0
      %568 = vmatpush1.bf16.msra.mxu0 0
      %569 = vmatprep.subr.bf16.mxu0 0
      %570 = vmatpush1.bf16.msra.mxu0 0
      %571 = vmatprep.subr.bf16.mxu0 0
      %572 = vmatpush1.bf16.msra.mxu0 0
      %573 = vmatprep.subr.bf16.mxu0 0
      %574 = vmatpush1.bf16.msra.mxu0 0
      %575 = vmatprep.subr.bf16.mxu0 0
      %576 = vmatpush1.bf16.msra.mxu0 0
      %577 = vmatprep.subr.bf16.mxu0 0
      %578 = vmatpush1.bf16.msra.mxu0 0
      %579 = vmatprep.subr.bf16.mxu0 0
      %580 = vmatpush1.bf16.msra.mxu0 0
      %581 = vmatprep.subr.bf16.mxu0 0
      %582 = vmatpush1.bf16.msra.mxu0 0
      %583 = vmatprep.subr.bf16.mxu0 0
      %584 = vmatpush1.bf16.msra.mxu0 0
      %585 = vmatprep.subr.bf16.mxu0 0
      %586 = vmatpush1.bf16.msra.mxu0 0
      %587 = vmatprep.subr.bf16.mxu0 0
      %588 = vmatpush1.bf16.msra.mxu0 0
      %589 = vmatprep.mubr.bf16.mxu0 0
      %590 = vmatmul.mubr.bf16.gmra.mrb[0].mxu0 %v555
      %v591 = vpop.f32.mrb[0].mxu0
      %v592 = vadd.f32 %v551, %v591
      %v593 = vpop.f32.mrb[0].mxu0
      %v594 = vpop.f32.mrb[0].mxu0
      %v595 = vpop.f32.mrb[0].mxu0
      %596 = vdwg.mxu0
      %597 = vst [vmem:[%s461] sm:$0xff] %v592
      %v598 = vld [vmem:[%s6] sm:$0xf]
      %v599 = vld [vmem:[%s6 + $0x4] sm:$0xf]
      %v600 = vld [vmem:[%s7] sm:$0xff]
      %v601 = vld [vmem:[%s7 + $0x8] sm:$0xff]
      %603 = vset.pattern.permute.xlu0 0
      %604 = vperm.xlu0 %603, %v600
      %v605 = vpop.permute.xlu0 %604
      %608 = vset.pattern.permute.xlu0 0
      %609 = vperm.xlu0 %608, %v601
      %v610 = vpop.permute.xlu0 %609
      %v614 = vunpack.c.l.b16 %v598
      %v615 = vunpack.c.l.b16 %v599
      %v616 = vpack.c.b16 %v615, %v614
      %v618 = vsel %vm494, %v616, 0
      %620 = vmatprep.subr.bf16.mxu0 0
      %621 = vmatpush1.bf16.msra.mxu0 %v500
      %622 = vmatprep.subr.bf16.mxu0 0
      %623 = vmatpush1.bf16.msra.mxu0 0
      %624 = vmatprep.subr.bf16.mxu0 0
      %625 = vmatpush1.bf16.msra.mxu0 0
      %626 = vmatprep.subr.bf16.mxu0 0
      %627 = vmatpush1.bf16.msra.mxu0 0
      %628 = vmatprep.subr.bf16.mxu0 0
      %629 = vmatpush1.bf16.msra.mxu0 0
      %630 = vmatprep.subr.bf16.mxu0 0
      %631 = vmatpush1.bf16.msra.mxu0 0
      %632 = vmatprep.subr.bf16.mxu0 0
      %633 = vmatpush1.bf16.msra.mxu0 0
      %634 = vmatprep.subr.bf16.mxu0 0
      %635 = vmatpush1.bf16.msra.mxu0 0
      %636 = vmatprep.subr.bf16.mxu0 0
      %637 = vmatpush1.bf16.msra.mxu0 0
      %638 = vmatprep.subr.bf16.mxu0 0
      %639 = vmatpush1.bf16.msra.mxu0 0
      %640 = vmatprep.subr.bf16.mxu0 0
      %641 = vmatpush1.bf16.msra.mxu0 0
      %642 = vmatprep.subr.bf16.mxu0 0
      %643 = vmatpush1.bf16.msra.mxu0 0
      %644 = vmatprep.subr.bf16.mxu0 0
      %645 = vmatpush1.bf16.msra.mxu0 0
      %646 = vmatprep.subr.bf16.mxu0 0
      %647 = vmatpush1.bf16.msra.mxu0 0
      %648 = vmatprep.subr.bf16.mxu0 0
      %649 = vmatpush1.bf16.msra.mxu0 0
      %650 = vmatprep.subr.bf16.mxu0 0
      %651 = vmatpush1.bf16.msra.mxu0 0
      %652 = vmatprep.mubr.bf16.mxu0 0
      %653 = vmatmul.mubr.bf16.gmra.mrb[0].mxu0 %v618
      %v654 = vpop.f32.mrb[0].mxu0
      %v655 = vadd.f32 %v605, %v654
      %v656 = vpop.f32.mrb[0].mxu0
      %v657 = vpop.f32.mrb[0].mxu0
      %v658 = vadd.f32 %v610, %v657
      %v659 = vpop.f32.mrb[0].mxu0
      %660 = vdwg.mxu0
      %v661 = vmax.f32 %v655, 0.0
      %v662 = vmax.f32 %v658, 0.0
      %v663 = vpack.c.bf16 %v662, %v661
      %v664 = vld [vmem:[%s8] sm:$0xf]
      %v665 = vld [vmem:[%s9] sm:$0xff]
      %667 = vset.pattern.permute.xlu0 0
      %668 = vperm.xlu0 %667, %v665
      %v669 = vpop.permute.xlu0 %668
      %v672 = vsel %vm553, %v664, 0
      %674 = vmatprep.subr.bf16.mxu0 0
      %675 = vmatpush1.bf16.msra.mxu0 %v663
      %676 = vmatprep.subr.bf16.mxu0 0
      %677 = vmatpush1.bf16.msra.mxu0 0
      %678 = vmatprep.subr.bf16.mxu0 0
      %679 = vmatpush1.bf16.msra.mxu0 0
      %680 = vmatprep.subr.bf16.mxu0 0
      %681 = vmatpush1.bf16.msra.mxu0 0
      %682 = vmatprep.subr.bf16.mxu0 0
      %683 = vmatpush1.bf16.msra.mxu0 0
      %684 = vmatprep.subr.bf16.mxu0 0
      %685 = vmatpush1.bf16.msra.mxu0 0
      %686 = vmatprep.subr.bf16.mxu0 0
      %687 = vmatpush1.bf16.msra.mxu0 0
      %688 = vmatprep.subr.bf16.mxu0 0
      %689 = vmatpush1.bf16.msra.mxu0 0
      %690 = vmatprep.subr.bf16.mxu0 0
      %691 = vmatpush1.bf16.msra.mxu0 0
      %692 = vmatprep.subr.bf16.mxu0 0
      %693 = vmatpush1.bf16.msra.mxu0 0
      %694 = vmatprep.subr.bf16.mxu0 0
      %695 = vmatpush1.bf16.msra.mxu0 0
      %696 = vmatprep.subr.bf16.mxu0 0
      %697 = vmatpush1.bf16.msra.mxu0 0
      %698 = vmatprep.subr.bf16.mxu0 0
      %699 = vmatpush1.bf16.msra.mxu0 0
      %700 = vmatprep.subr.bf16.mxu0 0
      %701 = vmatpush1.bf16.msra.mxu0 0
      %702 = vmatprep.subr.bf16.mxu0 0
      %703 = vmatpush1.bf16.msra.mxu0 0
      %704 = vmatprep.subr.bf16.mxu0 0
      %705 = vmatpush1.bf16.msra.mxu0 0
      %706 = vmatprep.mubr.bf16.mxu0 0
      %707 = vmatmul.mubr.bf16.gmra.mrb[0].mxu0 %v672
      %v708 = vpop.f32.mrb[0].mxu0
      %v709 = vadd.f32 %v669, %v708
      %v710 = vpop.f32.mrb[0].mxu0
      %v711 = vpop.f32.mrb[0].mxu0
      %v712 = vpop.f32.mrb[0].mxu0
      %713 = vdwg.mxu0
      %714 = vst [vmem:[%s469] sm:$0xff] %v709
      %p715 = scmp.lt.s32.totalorder %s27, 1
      %s716 = scalar_select %p715, %s27, 1
      %p717 = scmp.lt.s32.totalorder %s28, 1
      %s718 = scalar_select %p717, %s28, 1
      %s719 = smul.addr %s716, 2
      %s720 = sadd.s32 %s718, %s719
      %s721 = smul.addr %s720, 8
      %s722 = scalar_lea.vmem %s10, %s721
      %p723 = scmp.lt.s32.totalorder %s27, 1
      %s724 = scalar_select %p723, %s27, 1
      %p725 = scmp.lt.s32.totalorder %s28, 1
      %s726 = scalar_select %p725, %s28, 1
      %s727 = smul.addr %s724, 2
      %s728 = sadd.s32 %s726, %s727
      %s729 = smul.addr %s728, 8
      %s730 = scalar_lea.vmem %s11, %s729
      // Predicated region
      $region61: #{spectral_conv2d_forward.5} parent=59 // pred_check
        %p731 = pneg %p279
      $region62: #{spectral_conv2d_forward.5} parent=59 // pred_check_branch
        %733 = sbr.rel (%p731) target = $region64
      $region63: #{spectral_conv2d_forward.5} parent=59 // pred_region
        _
      $region64: #{spectral_conv2d_forward.5} parent=59 // pred_fallthru
        _
      // Predicated region
      $region65: #{spectral_conv2d_forward.5} parent=59 // pred_check
        %p734 = pneg %p307
      $region66: #{spectral_conv2d_forward.5} parent=59 // pred_check_branch
        %736 = sbr.rel (%p734) target = $region68
      $region67: #{spectral_conv2d_forward.5} parent=59 // pred_region
        _
      $region68: #{spectral_conv2d_forward.5} parent=59 // pred_fallthru
        _
    $region60: #{spectral_conv2d_forward.5} parent=5 // pred_fallthru
      _
    %p737 = scmp.le.s32.totalorder 2, %s18
    // Predicated region
    $region69: #{spectral_conv2d_forward.5} parent=5 // pred_check
      %p738 = pneg %p737
    $region70: #{spectral_conv2d_forward.5} parent=5 // pred_check_branch
      %740 = sbr.rel (%p738) target = $region72
    $region71: #{spectral_conv2d_forward.5} parent=5 // pred_region
      %s741 = ssub.s32 %s18, 2
      // Predicated region
      $region73: #{spectral_conv2d_forward.5} parent=71 // pred_check
        %p742 = pneg %p285
      $region74: #{spectral_conv2d_forward.5} parent=71 // pred_check_branch
        %744 = sbr.rel (%p742) target = $region76
      $region75: #{spectral_conv2d_forward.5} parent=71 // pred_region
        %p745 = scmp.lt.s32.totalorder %s29, 1
        %s746 = scalar_select %p745, %s29, 1
        %p747 = scmp.lt.s32.totalorder %s30, 1
        %s748 = scalar_select %p747, %s30, 1
        %s749 = smul.addr %s746, 2
        %s750 = sadd.s32 %s748, %s749
        %s751 = smul.addr %s750, 8
        %s752 = scalar_lea.vmem %s10, %s751
      $region76: #{spectral_conv2d_forward.5} parent=71 // pred_fallthru
        _
      // Predicated region
      $region77: #{spectral_conv2d_forward.5} parent=71 // pred_check
        %p753 = pneg %p313
      $region78: #{spectral_conv2d_forward.5} parent=71 // pred_check_branch
        %755 = sbr.rel (%p753) target = $region80
      $region79: #{spectral_conv2d_forward.5} parent=71 // pred_region
        %p756 = scmp.lt.s32.totalorder %s29, 1
        %s757 = scalar_select %p756, %s29, 1
        %p758 = scmp.lt.s32.totalorder %s30, 1
        %s759 = scalar_select %p758, %s30, 1
        %s760 = smul.addr %s757, 2
        %s761 = sadd.s32 %s759, %s760
        %s762 = smul.addr %s761, 8
        %s763 = scalar_lea.vmem %s11, %s762
      $region80: #{spectral_conv2d_forward.5} parent=71 // pred_fallthru
        _
    $region72: #{spectral_conv2d_forward.5} parent=5 // pred_fallthru
      _
  $region6: #{spectral_conv2d_forward.5} parent=0 // loop_footer
    %s22 = sadd.s32 1, %s18
  $region7: #{spectral_conv2d_forward.5} parent=0 // loop_footer_branch
    %17 = sbr.rel target = $region3
  $region8: #{spectral_conv2d_forward.5} parent=0 // loop_exit
    _

</llo_original>
